<compile_context>
chip_gen: v7x
topology: tpu7x:2x2x1
jax: 0.10.0
libtpu: 0.0.40
codegen_flags: <defaults>
</compile_context>

<pallas_src>
import functools

import jax
import jax.numpy as jnp
from jax.experimental import pallas as pl
from jax.experimental.pallas import tpu as pltpu


# ----------------------------- Pallas kernel -------------------------------

def _pair_norm_blocks(h, gt, nb, h_dim, eps=1e-5, scale=1.0):
    """PairNorm applied independently to each of the `gt` mini-batch blocks.

    Matches PyG PairNorm called WITHOUT a batch vector on each Nb-node block:
    center over the block's nodes, rescale by the RMS of per-node norms.
    """
    hb = h.reshape(gt, nb, h_dim)
    hc = hb - jnp.mean(hb, axis=1, keepdims=True)                   # [gt,Nb,H]
    s = jax.lax.rsqrt(eps + jnp.mean(jnp.sum(hc * hc, axis=2),
                                     axis=1, keepdims=True))        # [gt,1]
    return (scale * s[:, :, None] * hc).reshape(gt * nb, h_dim)


def gcn_superblock_kernel(pos_ref, a_ref, wc_ref, misc_ref, wo_ref, out_ref,
                          *, gt, nb, b, h_dim):
    """One grid step = one super-block of gt mini-batches (gt*nb nodes).

    pos_ref : [SB, 2]      node positions (SB = gt*nb), f32
    a_ref   : [SB, SB]     block-diagonal normalized adjacency, bf16
    wc_ref  : [H, 4H]      lane-dense weights: w1 | w2 | w3 | wl1 (lane blocks)
    misc_ref: [8, 4H]      row 0: we0 | we1 | be | bl1 ; row 1: b1 | b2 | b3 | 0
    wo_ref  : [H+8, 128]   lane-padded output head: wl2 rows 0:H, bl2 row H
    out_ref : [gt*b, 128]  lane-dense logits (valid lanes 0:2)
    """
    H = h_dim
    pos = pos_ref[...]                               # [SB, 2]  f32
    a = a_ref[...]                                   # [SB, SB] bf16

    we0 = misc_ref[0:1, 0:H]
    we1 = misc_ref[0:1, H:2 * H]
    be = misc_ref[0:1, 2 * H:3 * H]
    bl1 = misc_ref[0:1, 3 * H:4 * H]

    # emb_in + relu: K=2 contraction on the VPU (two broadcast FMAs), f32.
    h = pos[:, 0:1] * we0 + pos[:, 1:2] * we1 + be
    h = jnp.maximum(h, 0.0)

    # Three GCNConv layers: A_norm @ (h @ W) + b -> relu -> per-block PairNorm.
    # MXU operands in bf16, accumulation and all elementwise work in f32.
    for li in range(3):
        w = wc_ref[:, li * H:(li + 1) * H].astype(jnp.bfloat16)     # [H, H]
        bias = misc_ref[1:2, li * H:(li + 1) * H]                   # [1, H] f32
        hw = jnp.dot(h.astype(jnp.bfloat16), w,
                     preferred_element_type=jnp.float32)            # [SB, H]
        h = jnp.dot(a, hw.astype(jnp.bfloat16),
                    preferred_element_type=jnp.float32) + bias      # [SB, H]
        h = jnp.maximum(h, 0.0)
        h = _pair_norm_blocks(h, gt, nb, H)

    # global max pool: equal-size contiguous graphs -> mask-free reshape + max.
    # TODO(synk): ragged / variable-size graphs would need a masked pooling
    # path (and padding made numerically neutral upstream); not modeled here.
    npg = nb // b
    pooled = jnp.max(h.reshape(gt * b, npg, H), axis=1)              # [gt*b, H]

    # lin1 + relu (f32 MXU dot, tiny).
    wl1 = wc_ref[:, 3 * H:4 * H]                                     # [H, H]
    g = jnp.maximum(
        jnp.dot(pooled, wl1, preferred_element_type=jnp.float32) + bl1, 0.0)

    # dropout(p=0.2) is identity at inference; lin2, lane-padded to 128 lanes.
    out_ref[...] = (
        jnp.dot(g, wo_ref[0:H, :], preferred_element_type=jnp.float32)
        + wo_ref[H:H + 1, :])


# ------------------------------ JAX wrapper ----------------------------------

def pack_params(params):
    """Pack the 12 parameter tensors into 3 lane-dense VMEM slabs."""
    H = params["w1"].shape[0]

    # [H, 4H]: conv1 | conv2 | conv3 | lin1 weights as lane blocks.
    wc_slab = jnp.concatenate(
        [params["w1"], params["w2"], params["w3"], params["wl1"]],
        axis=1).astype(jnp.float32)

    # [8, 4H]: row 0 = we0 | we1 | be | bl1 ; row 1 = b1 | b2 | b3 | 0.
    misc_slab = jnp.zeros((8, 4 * H), jnp.float32)
    misc_slab = misc_slab.at[0, 0:H].set(params["we"][0])
    misc_slab = misc_slab.at[0, H:2 * H].set(params["we"][1])
    misc_slab = misc_slab.at[0, 2 * H:3 * H].set(params["be"].reshape(H))
    misc_slab = misc_slab.at[0, 3 * H:4 * H].set(params["bl1"].reshape(H))
    misc_slab = misc_slab.at[1, 0:H].set(params["b1"].reshape(H))
    misc_slab = misc_slab.at[1, H:2 * H].set(params["b2"].reshape(H))
    misc_slab = misc_slab.at[1, 2 * H:3 * H].set(params["b3"].reshape(H))

    # [H+8, 128]: lin2 weight (lanes 0:2) rows 0:H, lin2 bias row H.
    wo_slab = jnp.zeros((H + 8, 128), jnp.float32)
    wo_slab = wo_slab.at[0:H, 0:2].set(params["wl2"])
    wo_slab = wo_slab.at[H, 0:2].set(params["bl2"].reshape(2))
    return wc_slab, misc_slab, wo_slab


def gcn_forward(pos, a_norm, params, *, gt, nb, b):
    """pos: [S, SB, 2]; a_norm: [S, SB, SB] block-diag normalized adjacency.

    S grid steps, each a super-block of gt mini-batches (nb nodes, b graphs
    each, equal-size contiguous). Returns logits [S*gt*b, 2]."""
    S, SB, _ = pos.shape
    assert SB == gt * nb
    H = params["w1"].shape[0]
    GB = gt * b
    wc_slab, misc_slab, wo_slab = pack_params(params)

    kernel = functools.partial(
        gcn_superblock_kernel, gt=gt, nb=nb, b=b, h_dim=H)

    out_padded = pl.pallas_call(
        kernel,
        out_shape=jax.ShapeDtypeStruct((S, GB, 128), jnp.float32),
        grid=(S,),
        in_specs=[
            pl.BlockSpec((None, SB, 2), lambda s: (s, 0, 0)),
            pl.BlockSpec((None, SB, SB), lambda s: (s, 0, 0)),
            # Constant-index parameter slabs: fetched once, reused every step.
            pl.BlockSpec(wc_slab.shape, lambda s: (0, 0)),
            pl.BlockSpec(misc_slab.shape, lambda s: (0, 0)),
            pl.BlockSpec(wo_slab.shape, lambda s: (0, 0)),
        ],
        out_specs=pl.BlockSpec((None, GB, 128), lambda s: (s, 0, 0)),
        compiler_params=pltpu.CompilerParams(
            dimension_semantics=("parallel",)),
    )(pos, a_norm.astype(jnp.bfloat16), wc_slab, misc_slab, wo_slab)

    return out_padded[:, :, :2].reshape(S * GB, 2)


# ------------------------------- JAX glue -----------------------------------

def build_gcn_norm_adjacency(edge_index, edge_weight, num_nodes):
    """Dense D^{-1/2} (A + I) D^{-1/2}, matching PyG gcn_norm (aggr='add')."""
    src, dst = edge_index[0], edge_index[1]
    a = jnp.zeros((num_nodes, num_nodes), jnp.float32)
    a = a.at[dst, src].add(edge_weight.astype(jnp.float32))
    a = a + jnp.eye(num_nodes, dtype=jnp.float32)       # self loops, weight 1
    deg = jnp.sum(a, axis=1)
    dinv = jnp.where(deg > 0, jax.lax.rsqrt(deg), 0.0)
    return dinv[:, None] * a * dinv[None, :]


def init_params(key, hidden):
    ks = jax.random.split(key, 6)
    def lin(kw, fan_in, fan_out):
        return (jax.random.normal(kw, (fan_in, fan_out), jnp.float32)
                / jnp.sqrt(fan_in))
    return {
        "we":  lin(ks[0], 2, hidden),      "be":  jnp.zeros((1, hidden), jnp.float32),
        "w1":  lin(ks[1], hidden, hidden), "b1":  jnp.zeros((1, hidden), jnp.float32),
        "w2":  lin(ks[2], hidden, hidden), "b2":  jnp.zeros((1, hidden), jnp.float32),
        "w3":  lin(ks[3], hidden, hidden), "b3":  jnp.zeros((1, hidden), jnp.float32),
        "wl1": lin(ks[4], hidden, hidden), "bl1": jnp.zeros((1, hidden), jnp.float32),
        "wl2": lin(ks[5], hidden, 2),      "bl2": jnp.zeros((1, 2), jnp.float32),
    }


if __name__ == "__main__":
    H = 32            # hidden_channels
    B = 2             # graphs per mini-batch (one forward() call)
    NPG = 8           # nodes per graph
    Nb = B * NPG      # nodes per mini-batch block = 16
    Gt = 8            # mini-batches folded per grid step -> 128 node sublanes
    S = 2             # grid steps (>= 2 so both v7x TensorCores get work)
    SB = Gt * Nb      # 128

    key = jax.random.PRNGKey(0)
    k_pos, k_w, k_params = jax.random.split(key, 3)

    # data.pos per super-block: [S, SB, 2]
    pos = jax.random.normal(k_pos, (S, SB, 2), jnp.float32)

    # edge_index: bidirectional ring within each of the Gt*B graphs per block
    srcs, dsts = [], []
    for gi in range(Gt * B):
        off = gi * NPG
        for i in range(NPG):
            j = (i + 1) % NPG
            srcs += [off + i, off + j]
            dsts += [off + j, off + i]
    edge_index = jnp.array([srcs, dsts], jnp.int32)
    E = edge_index.shape[1]

    # positive scalar edge weights, distinct per super-block
    edge_attr = jax.random.uniform(k_w, (S, E), jnp.float32, 0.5, 1.5)

    # block-diagonal normalized adjacency per super-block -> [S, SB, SB]
    a_norm = jnp.stack([
        build_gcn_norm_adjacency(edge_index, edge_attr[s], SB)
        for s in range(S)])

    params = init_params(k_params, H)

    # TODO(synk): `aggr_method` other than 'add' (mean/max message aggregation)
    # is not modeled; the dense A_norm matmul reproduces GCNConv's default sum.
    out = jax.block_until_ready(
        gcn_forward(pos, a_norm, params, gt=Gt, nb=Nb, b=B))
    assert out.shape == (S * Gt * B, 2) and out.dtype == jnp.float32
    print("KERNEL_OK")
</pallas_src>

<mosaic_0001>
module attributes {stable_mosaic.version = 11 : i64} {
  func.func @gcn_superblock_kernel(%arg0: i32, %arg1: memref<1x128x2xf32, #tpu.memory_space<vmem>>, %arg2: memref<1x128x128xbf16, #tpu.memory_space<vmem>>, %arg3: memref<32x128xf32, #tpu.memory_space<vmem>>, %arg4: memref<8x128xf32, #tpu.memory_space<vmem>>, %arg5: memref<40x128xf32, #tpu.memory_space<vmem>>, %arg6: memref<1x16x128xf32, #tpu.memory_space<vmem>>) attributes {dimension_semantics = [#tpu.dimension_semantics<parallel>], iteration_bounds = array<i64: 2>, scalar_prefetch = 0 : i64, scratch_operands = 0 : i64, tpu.core_type = #tpu.core_type<tc>, window_params = [{transform_indices = @transform_0, window_bounds = array<i64: 1, 128, 2>}, {transform_indices = @transform_1, window_bounds = array<i64: 1, 128, 128>}, {pipeline_mode = #tpu.pipeline_mode<synchronous>, transform_indices = @transform_2, window_bounds = array<i64: 32, 128>}, {pipeline_mode = #tpu.pipeline_mode<synchronous>, transform_indices = @transform_3, window_bounds = array<i64: 8, 128>}, {pipeline_mode = #tpu.pipeline_mode<synchronous>, transform_indices = @transform_4, window_bounds = array<i64: 40, 128>}, {transform_indices = @transform_5, window_bounds = array<i64: 1, 16, 128>}]} {
    %c0 = arith.constant 0 : index
    %c0_0 = arith.constant 0 : index
    %c0_1 = arith.constant 0 : index
    %0 = vector.load %arg1[%c0, %c0_0, %c0_1] : memref<1x128x2xf32, #tpu.memory_space<vmem>>, vector<1x128x2xf32>
    %1 = vector.shape_cast %0 : vector<1x128x2xf32> to vector<128x2xf32>
    %c0_2 = arith.constant 0 : index
    %c0_3 = arith.constant 0 : index
    %c0_4 = arith.constant 0 : index
    %2 = vector.load %arg2[%c0_2, %c0_3, %c0_4] : memref<1x128x128xbf16, #tpu.memory_space<vmem>>, vector<1x128x128xbf16>
    %3 = vector.shape_cast %2 : vector<1x128x128xbf16> to vector<128x128xbf16>
    %c0_5 = arith.constant 0 : index
    %c0_6 = arith.constant 0 : index
    %4 = vector.load %arg4[%c0_5, %c0_6] : memref<8x128xf32, #tpu.memory_space<vmem>>, vector<1x32xf32>
    %c0_7 = arith.constant 0 : index
    %c32 = arith.constant 32 : index
    %5 = vector.load %arg4[%c0_7, %c32] : memref<8x128xf32, #tpu.memory_space<vmem>>, vector<1x32xf32>
    %c0_8 = arith.constant 0 : index
    %c64 = arith.constant 64 : index
    %6 = vector.load %arg4[%c0_8, %c64] : memref<8x128xf32, #tpu.memory_space<vmem>>, vector<1x32xf32>
    %c0_9 = arith.constant 0 : index
    %c96 = arith.constant 96 : index
    %7 = vector.load %arg4[%c0_9, %c96] : memref<8x128xf32, #tpu.memory_space<vmem>>, vector<1x32xf32>
    %8 = vector.extract_strided_slice %1 {offsets = [0, 0], sizes = [128, 1], strides = [1, 1]} : vector<128x2xf32> to vector<128x1xf32>
    %9 = vector.broadcast %8 : vector<128x1xf32> to vector<128x32xf32>
    %10 = vector.broadcast %4 : vector<1x32xf32> to vector<128x32xf32>
    %11 = arith.mulf %9, %10 : vector<128x32xf32>
    %12 = vector.extract_strided_slice %1 {offsets = [0, 1], sizes = [128, 1], strides = [1, 1]} : vector<128x2xf32> to vector<128x1xf32>
    %13 = vector.broadcast %12 : vector<128x1xf32> to vector<128x32xf32>
    %14 = vector.broadcast %5 : vector<1x32xf32> to vector<128x32xf32>
    %15 = arith.mulf %13, %14 : vector<128x32xf32>
    %16 = arith.addf %11, %15 : vector<128x32xf32>
    %17 = vector.broadcast %6 : vector<1x32xf32> to vector<128x32xf32>
    %18 = arith.addf %16, %17 : vector<128x32xf32>
    %cst = arith.constant 0.000000e+00 : f32
    %19 = vector.broadcast %cst : f32 to vector<128x32xf32>
    %20 = arith.maximumf %18, %19 : vector<128x32xf32>
    %c0_10 = arith.constant 0 : index
    %c0_11 = arith.constant 0 : index
    %21 = vector.load %arg3[%c0_10, %c0_11] : memref<32x128xf32, #tpu.memory_space<vmem>>, vector<32x32xf32>
    %22 = arith.truncf %21 : vector<32x32xf32> to vector<32x32xbf16>
    %c1 = arith.constant 1 : index
    %c0_12 = arith.constant 0 : index
    %23 = vector.load %arg4[%c1, %c0_12] : memref<8x128xf32, #tpu.memory_space<vmem>>, vector<1x32xf32>
    %24 = arith.truncf %20 : vector<128x32xf32> to vector<128x32xbf16>
    %cst_13 = arith.constant dense<0.000000e+00> : vector<128x32xf32>
    %25 = tpu.matmul %24, %22, %cst_13 {dimension_numbers = #tpu.dot_dimension_numbers<[1], [0], [0], [1], [0, 0, 1, 1], [], []>} : vector<128x32xbf16>, vector<32x32xbf16>, vector<128x32xf32> -> vector<128x32xf32>
    %26 = arith.truncf %25 : vector<128x32xf32> to vector<128x32xbf16>
    %cst_14 = arith.constant dense<0.000000e+00> : vector<128x32xf32>
    %27 = tpu.matmul %3, %26, %cst_14 {dimension_numbers = #tpu.dot_dimension_numbers<[1], [0], [0], [1], [0, 0, 1, 1], [], []>} : vector<128x128xbf16>, vector<128x32xbf16>, vector<128x32xf32> -> vector<128x32xf32>
    %28 = vector.broadcast %23 : vector<1x32xf32> to vector<128x32xf32>
    %29 = arith.addf %27, %28 : vector<128x32xf32>
    %cst_15 = arith.constant 0.000000e+00 : f32
    %30 = vector.broadcast %cst_15 : f32 to vector<128x32xf32>
    %31 = arith.maximumf %29, %30 : vector<128x32xf32>
    %32 = vector.shape_cast %31 : vector<128x32xf32> to vector<8x16x32xf32>
    %cst_16 = arith.constant dense<0.000000e+00> : vector<8x32xf32>
    %33 = vector.multi_reduction <add>, %32, %cst_16 [1] : vector<8x16x32xf32> to vector<8x32xf32>
    %34 = vector.shape_cast %33 : vector<8x32xf32> to vector<8x1x32xf32>
    %cst_17 = arith.constant 1.600000e+01 : f32
    %35 = vector.broadcast %cst_17 : f32 to vector<8x1x32xf32>
    %36 = arith.divf %34, %35 : vector<8x1x32xf32>
    %37 = vector.broadcast %36 : vector<8x1x32xf32> to vector<8x16x32xf32>
    %38 = arith.subf %32, %37 : vector<8x16x32xf32>
    %39 = arith.mulf %38, %38 : vector<8x16x32xf32>
    %cst_18 = arith.constant dense<0.000000e+00> : vector<8x16xf32>
    %40 = vector.multi_reduction <add>, %39, %cst_18 [2] : vector<8x16x32xf32> to vector<8x16xf32>
    %cst_19 = arith.constant dense<0.000000e+00> : vector<8xf32>
    %41 = vector.multi_reduction <add>, %40, %cst_19 [1] : vector<8x16xf32> to vector<8xf32>
    %42 = vector.shape_cast %41 : vector<8xf32> to vector<8x1xf32>
    %cst_20 = arith.constant 1.600000e+01 : f32
    %43 = vector.broadcast %cst_20 : f32 to vector<8x1xf32>
    %44 = arith.divf %42, %43 : vector<8x1xf32>
    %cst_21 = arith.constant 9.99999974E-6 : f32
    %45 = vector.broadcast %cst_21 : f32 to vector<8x1xf32>
    %46 = arith.addf %45, %44 : vector<8x1xf32>
    %47 = math.rsqrt %46 : vector<8x1xf32>
    %48 = vector.shape_cast %47 : vector<8x1xf32> to vector<8x1x1xf32>
    %cst_22 = arith.constant 1.000000e+00 : f32
    %49 = vector.broadcast %cst_22 : f32 to vector<8x1x1xf32>
    %50 = arith.mulf %49, %48 : vector<8x1x1xf32>
    %51 = vector.broadcast %50 : vector<8x1x1xf32> to vector<8x16x32xf32>
    %52 = arith.mulf %51, %38 : vector<8x16x32xf32>
    %53 = vector.shape_cast %52 : vector<8x16x32xf32> to vector<128x32xf32>
    %c0_23 = arith.constant 0 : index
    %c32_24 = arith.constant 32 : index
    %54 = vector.load %arg3[%c0_23, %c32_24] : memref<32x128xf32, #tpu.memory_space<vmem>>, vector<32x32xf32>
    %55 = arith.truncf %54 : vector<32x32xf32> to vector<32x32xbf16>
    %c1_25 = arith.constant 1 : index
    %c32_26 = arith.constant 32 : index
    %56 = vector.load %arg4[%c1_25, %c32_26] : memref<8x128xf32, #tpu.memory_space<vmem>>, vector<1x32xf32>
    %57 = arith.truncf %53 : vector<128x32xf32> to vector<128x32xbf16>
    %cst_27 = arith.constant dense<0.000000e+00> : vector<128x32xf32>
    %58 = tpu.matmul %57, %55, %cst_27 {dimension_numbers = #tpu.dot_dimension_numbers<[1], [0], [0], [1], [0, 0, 1, 1], [], []>} : vector<128x32xbf16>, vector<32x32xbf16>, vector<128x32xf32> -> vector<128x32xf32>
    %59 = arith.truncf %58 : vector<128x32xf32> to vector<128x32xbf16>
    %cst_28 = arith.constant dense<0.000000e+00> : vector<128x32xf32>
    %60 = tpu.matmul %3, %59, %cst_28 {dimension_numbers = #tpu.dot_dimension_numbers<[1], [0], [0], [1], [0, 0, 1, 1], [], []>} : vector<128x128xbf16>, vector<128x32xbf16>, vector<128x32xf32> -> vector<128x32xf32>
    %61 = vector.broadcast %56 : vector<1x32xf32> to vector<128x32xf32>
    %62 = arith.addf %60, %61 : vector<128x32xf32>
    %cst_29 = arith.constant 0.000000e+00 : f32
    %63 = vector.broadcast %cst_29 : f32 to vector<128x32xf32>
    %64 = arith.maximumf %62, %63 : vector<128x32xf32>
    %65 = vector.shape_cast %64 : vector<128x32xf32> to vector<8x16x32xf32>
    %cst_30 = arith.constant dense<0.000000e+00> : vector<8x32xf32>
    %66 = vector.multi_reduction <add>, %65, %cst_30 [1] : vector<8x16x32xf32> to vector<8x32xf32>
    %67 = vector.shape_cast %66 : vector<8x32xf32> to vector<8x1x32xf32>
    %cst_31 = arith.constant 1.600000e+01 : f32
    %68 = vector.broadcast %cst_31 : f32 to vector<8x1x32xf32>
    %69 = arith.divf %67, %68 : vector<8x1x32xf32>
    %70 = vector.broadcast %69 : vector<8x1x32xf32> to vector<8x16x32xf32>
    %71 = arith.subf %65, %70 : vector<8x16x32xf32>
    %72 = arith.mulf %71, %71 : vector<8x16x32xf32>
    %cst_32 = arith.constant dense<0.000000e+00> : vector<8x16xf32>
    %73 = vector.multi_reduction <add>, %72, %cst_32 [2] : vector<8x16x32xf32> to vector<8x16xf32>
    %cst_33 = arith.constant dense<0.000000e+00> : vector<8xf32>
    %74 = vector.multi_reduction <add>, %73, %cst_33 [1] : vector<8x16xf32> to vector<8xf32>
    %75 = vector.shape_cast %74 : vector<8xf32> to vector<8x1xf32>
    %cst_34 = arith.constant 1.600000e+01 : f32
    %76 = vector.broadcast %cst_34 : f32 to vector<8x1xf32>
    %77 = arith.divf %75, %76 : vector<8x1xf32>
    %cst_35 = arith.constant 9.99999974E-6 : f32
    %78 = vector.broadcast %cst_35 : f32 to vector<8x1xf32>
    %79 = arith.addf %78, %77 : vector<8x1xf32>
    %80 = math.rsqrt %79 : vector<8x1xf32>
    %81 = vector.shape_cast %80 : vector<8x1xf32> to vector<8x1x1xf32>
    %cst_36 = arith.constant 1.000000e+00 : f32
    %82 = vector.broadcast %cst_36 : f32 to vector<8x1x1xf32>
    %83 = arith.mulf %82, %81 : vector<8x1x1xf32>
    %84 = vector.broadcast %83 : vector<8x1x1xf32> to vector<8x16x32xf32>
    %85 = arith.mulf %84, %71 : vector<8x16x32xf32>
    %86 = vector.shape_cast %85 : vector<8x16x32xf32> to vector<128x32xf32>
    %c0_37 = arith.constant 0 : index
    %c64_38 = arith.constant 64 : index
    %87 = vector.load %arg3[%c0_37, %c64_38] : memref<32x128xf32, #tpu.memory_space<vmem>>, vector<32x32xf32>
    %88 = arith.truncf %87 : vector<32x32xf32> to vector<32x32xbf16>
    %c1_39 = arith.constant 1 : index
    %c64_40 = arith.constant 64 : index
    %89 = vector.load %arg4[%c1_39, %c64_40] : memref<8x128xf32, #tpu.memory_space<vmem>>, vector<1x32xf32>
    %90 = arith.truncf %86 : vector<128x32xf32> to vector<128x32xbf16>
    %cst_41 = arith.constant dense<0.000000e+00> : vector<128x32xf32>
    %91 = tpu.matmul %90, %88, %cst_41 {dimension_numbers = #tpu.dot_dimension_numbers<[1], [0], [0], [1], [0, 0, 1, 1], [], []>} : vector<128x32xbf16>, vector<32x32xbf16>, vector<128x32xf32> -> vector<128x32xf32>
    %92 = arith.truncf %91 : vector<128x32xf32> to vector<128x32xbf16>
    %cst_42 = arith.constant dense<0.000000e+00> : vector<128x32xf32>
    %93 = tpu.matmul %3, %92, %cst_42 {dimension_numbers = #tpu.dot_dimension_numbers<[1], [0], [0], [1], [0, 0, 1, 1], [], []>} : vector<128x128xbf16>, vector<128x32xbf16>, vector<128x32xf32> -> vector<128x32xf32>
    %94 = vector.broadcast %89 : vector<1x32xf32> to vector<128x32xf32>
    %95 = arith.addf %93, %94 : vector<128x32xf32>
    %cst_43 = arith.constant 0.000000e+00 : f32
    %96 = vector.broadcast %cst_43 : f32 to vector<128x32xf32>
    %97 = arith.maximumf %95, %96 : vector<128x32xf32>
    %98 = vector.shape_cast %97 : vector<128x32xf32> to vector<8x16x32xf32>
    %cst_44 = arith.constant dense<0.000000e+00> : vector<8x32xf32>
    %99 = vector.multi_reduction <add>, %98, %cst_44 [1] : vector<8x16x32xf32> to vector<8x32xf32>
    %100 = vector.shape_cast %99 : vector<8x32xf32> to vector<8x1x32xf32>
    %cst_45 = arith.constant 1.600000e+01 : f32
    %101 = vector.broadcast %cst_45 : f32 to vector<8x1x32xf32>
    %102 = arith.divf %100, %101 : vector<8x1x32xf32>
    %103 = vector.broadcast %102 : vector<8x1x32xf32> to vector<8x16x32xf32>
    %104 = arith.subf %98, %103 : vector<8x16x32xf32>
    %105 = arith.mulf %104, %104 : vector<8x16x32xf32>
    %cst_46 = arith.constant dense<0.000000e+00> : vector<8x16xf32>
    %106 = vector.multi_reduction <add>, %105, %cst_46 [2] : vector<8x16x32xf32> to vector<8x16xf32>
    %cst_47 = arith.constant dense<0.000000e+00> : vector<8xf32>
    %107 = vector.multi_reduction <add>, %106, %cst_47 [1] : vector<8x16xf32> to vector<8xf32>
    %108 = vector.shape_cast %107 : vector<8xf32> to vector<8x1xf32>
    %cst_48 = arith.constant 1.600000e+01 : f32
    %109 = vector.broadcast %cst_48 : f32 to vector<8x1xf32>
    %110 = arith.divf %108, %109 : vector<8x1xf32>
    %cst_49 = arith.constant 9.99999974E-6 : f32
    %111 = vector.broadcast %cst_49 : f32 to vector<8x1xf32>
    %112 = arith.addf %111, %110 : vector<8x1xf32>
    %113 = math.rsqrt %112 : vector<8x1xf32>
    %114 = vector.shape_cast %113 : vector<8x1xf32> to vector<8x1x1xf32>
    %cst_50 = arith.constant 1.000000e+00 : f32
    %115 = vector.broadcast %cst_50 : f32 to vector<8x1x1xf32>
    %116 = arith.mulf %115, %114 : vector<8x1x1xf32>
    %117 = vector.broadcast %116 : vector<8x1x1xf32> to vector<8x16x32xf32>
    %118 = arith.mulf %117, %104 : vector<8x16x32xf32>
    %119 = vector.shape_cast %118 : vector<8x16x32xf32> to vector<128x32xf32>
    %120 = vector.shape_cast %119 : vector<128x32xf32> to vector<16x8x32xf32>
    %cst_51 = arith.constant dense<0xFF800000> : vector<16x32xf32>
    %121 = vector.multi_reduction <maximumf>, %120, %cst_51 [1] : vector<16x8x32xf32> to vector<16x32xf32>
    %c0_52 = arith.constant 0 : index
    %c96_53 = arith.constant 96 : index
    %122 = vector.load %arg3[%c0_52, %c96_53] : memref<32x128xf32, #tpu.memory_space<vmem>>, vector<32x32xf32>
    %cst_54 = arith.constant dense<0.000000e+00> : vector<16x32xf32>
    %123 = tpu.matmul %121, %122, %cst_54 {dimension_numbers = #tpu.dot_dimension_numbers<[1], [0], [0], [1], [0, 0, 1, 1], [], []>} : vector<16x32xf32>, vector<32x32xf32>, vector<16x32xf32> -> vector<16x32xf32>
    %124 = vector.broadcast %7 : vector<1x32xf32> to vector<16x32xf32>
    %125 = arith.addf %123, %124 : vector<16x32xf32>
    %cst_55 = arith.constant 0.000000e+00 : f32
    %126 = vector.broadcast %cst_55 : f32 to vector<16x32xf32>
    %127 = arith.maximumf %125, %126 : vector<16x32xf32>
    %c0_56 = arith.constant 0 : index
    %c0_57 = arith.constant 0 : index
    %128 = vector.load %arg5[%c0_56, %c0_57] : memref<40x128xf32, #tpu.memory_space<vmem>>, vector<32x128xf32>
    %cst_58 = arith.constant dense<0.000000e+00> : vector<16x128xf32>
    %129 = tpu.matmul %127, %128, %cst_58 {dimension_numbers = #tpu.dot_dimension_numbers<[1], [0], [0], [1], [0, 0, 1, 1], [], []>} : vector<16x32xf32>, vector<32x128xf32>, vector<16x128xf32> -> vector<16x128xf32>
    %c32_59 = arith.constant 32 : index
    %c0_60 = arith.constant 0 : index
    %130 = vector.load %arg5[%c32_59, %c0_60] : memref<40x128xf32, #tpu.memory_space<vmem>>, vector<1x128xf32>
    %131 = vector.broadcast %130 : vector<1x128xf32> to vector<16x128xf32>
    %132 = arith.addf %129, %131 : vector<16x128xf32>
    %c0_61 = arith.constant 0 : index
    %c0_62 = arith.constant 0 : index
    %c0_63 = arith.constant 0 : index
    %133 = vector.load %arg6[%c0_61, %c0_62, %c0_63] : memref<1x16x128xf32, #tpu.memory_space<vmem>>, vector<1x16x128xf32>
    %134 = vector.shape_cast %133 : vector<1x16x128xf32> to vector<16x128xf32>
    %135 = vector.shape_cast %132 : vector<16x128xf32> to vector<1x16x128xf32>
    tpu.vector_store %arg6[%c0_61, %c0_62, %c0_63], %135 {strides = array<i32>} : memref<1x16x128xf32, #tpu.memory_space<vmem>>, vector<1x16x128xf32>,
    return
  }
  func.func @transform_0(%arg0: i32) -> (i32, i32, i32) {
    %c0_i32 = arith.constant 0 : i32
    %c0_i32_0 = arith.constant 0 : i32
    %c0_i32_1 = arith.constant 0 : i32
    return %arg0, %c0_i32, %c0_i32_0 : i32, i32, i32
  }
  func.func @transform_1(%arg0: i32) -> (i32, i32, i32) {
    %c0_i32 = arith.constant 0 : i32
    %c0_i32_0 = arith.constant 0 : i32
    %c0_i32_1 = arith.constant 0 : i32
    return %arg0, %c0_i32, %c0_i32_0 : i32, i32, i32
  }
  func.func @transform_2(%arg0: i32) -> (i32, i32) {
    %c0_i32 = arith.constant 0 : i32
    %c0_i32_0 = arith.constant 0 : i32
    %c0_i32_1 = arith.constant 0 : i32
    return %c0_i32, %c0_i32_0 : i32, i32
  }
  func.func @transform_3(%arg0: i32) -> (i32, i32) {
    %c0_i32 = arith.constant 0 : i32
    %c0_i32_0 = arith.constant 0 : i32
    %c0_i32_1 = arith.constant 0 : i32
    return %c0_i32, %c0_i32_0 : i32, i32
  }
  func.func @transform_4(%arg0: i32) -> (i32, i32) {
    %c0_i32 = arith.constant 0 : i32
    %c0_i32_0 = arith.constant 0 : i32
    %c0_i32_1 = arith.constant 0 : i32
    return %c0_i32, %c0_i32_0 : i32, i32
  }
  func.func @transform_5(%arg0: i32) -> (i32, i32, i32) {
    %c0_i32 = arith.constant 0 : i32
    %c0_i32_0 = arith.constant 0 : i32
    %c0_i32_1 = arith.constant 0 : i32
    return %arg0, %c0_i32, %c0_i32_0 : i32, i32, i32
  }
}

</mosaic_0001>

<llo_original>
// kernel: tpu_custom_call.1
$region0: #{tpu_custom_call.1}
  #allocation0 [shape = 'u32[]', space=smem, size = 0x4, offset = 0x4, fixed_abs, tag = 'smem constant byte address 0x4 - core index']
  #allocation1 [shape = 'u32[144,128]{1,0:T(1,128)}', space=vmem, size = 0x12000, scoped, tag = 'internal scratch']
  %s0 = inlined_call_operand.vmem [shape: f32[2,128,2], index: 0, kind: input, shape index: {}]
  %s1 = inlined_call_operand.vmem [shape: bf16[2,128,128], index: 1, kind: input, shape index: {}]
  %s2 = inlined_call_operand.vmem [shape: f32[32,128], index: 2, kind: input, shape index: {}]
  %s3 = inlined_call_operand.vmem [shape: f32[8,128], index: 3, kind: input, shape index: {}]
  %s4 = inlined_call_operand.vmem [shape: f32[40,128], index: 4, kind: input, shape index: {}]
  %s5 = inlined_call_operand.hbm [shape: f32[2,16,128], index: 5, kind: output, shape index: {}]
  %s6 = sld [smem:[#allocation0]]
  $region53: #{tpu_custom_call.1} parent=0
    _
  %s8 = ssub.s32 1, %s6
  %s9 = scalar_select 0, %s8, %s6
  $region1: #{tpu_custom_call.1} parent=0
    #allocation2 [shape = 'u8[16384]{0}', space=vmem, size = 0x4000, scoped, tag = 'output window, operand 0']
    #allocation3 [shape = 's32[2]{0}', space=sflag, size = 0x8, scoped, tag = 'scoped memory for tpu_custom_call.1']
    %10 = vsyncpa [#allocation3], 0
    %s11 = scalar_lea.sflag [#allocation3], 1
    %12 = vsyncpa %s11, 0
    loop: start=0, step=1, limit=4
    $region2: #{tpu_custom_call.1} parent=1 // loop_pre_header
      _
    $region3: #{tpu_custom_call.1} parent=1 // loop_header
      %s14 = sphi 0, %s18
      %p15 = scmp.ge.s32.totalorder %s14, 4
      %s24 = sphi 0, %s26
      %s27 = sphi 0, %s24
      %s28 = sphi 0, %s27
      %s44 = sphi 0, %s28
      %s50 = sphi 0, %s52
      %s53 = sphi 0, %s50
      %s54 = sphi 0, %s53
      %s70 = sphi 0, %s54
      %s74 = sphi 0, %s74
      %s76 = sphi 0, %s74
      %s77 = sphi 0, %s76
      %s91 = sphi 0, %s77
      %s95 = sphi 0, %s95
      %s97 = sphi 0, %s95
      %s98 = sphi 0, %s97
      %s112 = sphi 0, %s98
      %s116 = sphi 0, %s116
      %s118 = sphi 0, %s116
      %s119 = sphi 0, %s118
      %s133 = sphi 0, %s119
      %s139 = sphi 0, %s141
      %s142 = sphi 0, %s139
      %s143 = sphi 0, %s142
      %s159 = sphi 0, %s143
    $region4: #{tpu_custom_call.1} parent=1 // loop_header_branch
      %17 = sbr.rel (%p15) target = $region8
    $region5: #{tpu_custom_call.1} parent=1 // loop_body
      %s19 = ssub.s32 %s14, 1
      %s20 = ssub.s32 %s14, 2
      %s21 = sadd.s32 %s14, 1
      %s22 = ssub.s32 %s14, %s21
      %p23 = scmp.eq.s32.totalorder %s22, 0
      %s25 = sadd.s32 %s24, 1
      %s26 = scalar_select %p23, %s24, %s25
      %p29 = pneg %p23
      %p30 = scmp.eq.s32.totalorder %s14, 1
      %p31 = por %p29, %p30
      %p32 = scmp.ne.s32.totalorder %s24, %s27
      %p33 = scmp.eq.s32.totalorder %s14, 0
      %p34 = por %p32, %p33
      %p35 = scmp.ne.s32.totalorder %s24, %s27
      %p36 = scmp.eq.s32.totalorder %s19, 1
      %p37 = por %p35, %p36
      %p38 = scmp.ne.s32.totalorder %s27, %s28
      %p39 = scmp.eq.s32.totalorder %s19, 0
      %p40 = por %p38, %p39
      %p41 = scmp.ne.s32.totalorder %s27, %s28
      %p42 = scmp.eq.s32.totalorder %s20, 1
      %p43 = por %p41, %p42
      %p45 = scmp.ne.s32.totalorder %s28, %s44
      %p46 = scmp.eq.s32.totalorder %s20, 0
      %p47 = por %p45, %p46
      %s48 = ssub.s32 %s14, %s21
      %p49 = scmp.eq.s32.totalorder %s48, 0
      %s51 = sadd.s32 %s50, 1
      %s52 = scalar_select %p49, %s50, %s51
      %p55 = pneg %p49
      %p56 = scmp.eq.s32.totalorder %s14, 1
      %p57 = por %p55, %p56
      %p58 = scmp.ne.s32.totalorder %s50, %s53
      %p59 = scmp.eq.s32.totalorder %s14, 0
      %p60 = por %p58, %p59
      %p61 = scmp.ne.s32.totalorder %s50, %s53
      %p62 = scmp.eq.s32.totalorder %s19, 1
      %p63 = por %p61, %p62
      %p64 = scmp.ne.s32.totalorder %s53, %s54
      %p65 = scmp.eq.s32.totalorder %s19, 0
      %p66 = por %p64, %p65
      %p67 = scmp.ne.s32.totalorder %s53, %s54
      %p68 = scmp.eq.s32.totalorder %s20, 1
      %p69 = por %p67, %p68
      %p71 = scmp.ne.s32.totalorder %s54, %s70
      %p72 = scmp.eq.s32.totalorder %s20, 0
      %p73 = por %p71, %p72
      %s75 = sadd.s32 %s74, 1
      %p78 = scmp.eq.s32.totalorder %s14, 1
      %p79 = scmp.ne.s32.totalorder %s74, %s76
      %p80 = scmp.eq.s32.totalorder %s14, 0
      %p81 = por %p79, %p80
      %p82 = scmp.ne.s32.totalorder %s74, %s76
      %p83 = scmp.eq.s32.totalorder %s19, 1
      %p84 = por %p82, %p83
      %p85 = scmp.ne.s32.totalorder %s76, %s77
      %p86 = scmp.eq.s32.totalorder %s19, 0
      %p87 = por %p85, %p86
      %p88 = scmp.ne.s32.totalorder %s76, %s77
      %p89 = scmp.eq.s32.totalorder %s20, 1
      %p90 = por %p88, %p89
      %p92 = scmp.ne.s32.totalorder %s77, %s91
      %p93 = scmp.eq.s32.totalorder %s20, 0
      %p94 = por %p92, %p93
      %s96 = sadd.s32 %s95, 1
      %p99 = scmp.eq.s32.totalorder %s14, 1
      %p100 = scmp.ne.s32.totalorder %s95, %s97
      %p101 = scmp.eq.s32.totalorder %s14, 0
      %p102 = por %p100, %p101
      %p103 = scmp.ne.s32.totalorder %s95, %s97
      %p104 = scmp.eq.s32.totalorder %s19, 1
      %p105 = por %p103, %p104
      %p106 = scmp.ne.s32.totalorder %s97, %s98
      %p107 = scmp.eq.s32.totalorder %s19, 0
      %p108 = por %p106, %p107
      %p109 = scmp.ne.s32.totalorder %s97, %s98
      %p110 = scmp.eq.s32.totalorder %s20, 1
      %p111 = por %p109, %p110
      %p113 = scmp.ne.s32.totalorder %s98, %s112
      %p114 = scmp.eq.s32.totalorder %s20, 0
      %p115 = por %p113, %p114
      %s117 = sadd.s32 %s116, 1
      %p120 = scmp.eq.s32.totalorder %s14, 1
      %p121 = scmp.ne.s32.totalorder %s116, %s118
      %p122 = scmp.eq.s32.totalorder %s14, 0
      %p123 = por %p121, %p122
      %p124 = scmp.ne.s32.totalorder %s116, %s118
      %p125 = scmp.eq.s32.totalorder %s19, 1
      %p126 = por %p124, %p125
      %p127 = scmp.ne.s32.totalorder %s118, %s119
      %p128 = scmp.eq.s32.totalorder %s19, 0
      %p129 = por %p127, %p128
      %p130 = scmp.ne.s32.totalorder %s118, %s119
      %p131 = scmp.eq.s32.totalorder %s20, 1
      %p132 = por %p130, %p131
      %p134 = scmp.ne.s32.totalorder %s119, %s133
      %p135 = scmp.eq.s32.totalorder %s20, 0
      %p136 = por %p134, %p135
      %s137 = ssub.s32 %s14, %s21
      %p138 = scmp.eq.s32.totalorder %s137, 0
      %s140 = sadd.s32 %s139, 1
      %s141 = scalar_select %p138, %s139, %s140
      %p144 = pneg %p138
      %p145 = scmp.eq.s32.totalorder %s14, 1
      %p146 = por %p144, %p145
      %p147 = scmp.ne.s32.totalorder %s139, %s142
      %p148 = scmp.eq.s32.totalorder %s14, 0
      %p149 = por %p147, %p148
      %p150 = scmp.ne.s32.totalorder %s139, %s142
      %p151 = scmp.eq.s32.totalorder %s19, 1
      %p152 = por %p150, %p151
      %p153 = scmp.ne.s32.totalorder %s142, %s143
      %p154 = scmp.eq.s32.totalorder %s19, 0
      %p155 = por %p153, %p154
      %p156 = scmp.ne.s32.totalorder %s142, %s143
      %p157 = scmp.eq.s32.totalorder %s20, 1
      %p158 = por %p156, %p157
      %p160 = scmp.ne.s32.totalorder %s143, %s159
      %p161 = scmp.eq.s32.totalorder %s20, 0
      %p162 = por %p160, %p161
      %p163 = scmp.le.s32.totalorder 1, %s14
      %p164 = scmp.lt.s32.totalorder %s14, 3
      %p165 = pnand %p163, %p164
      %p166 = pneg %p165
      // Predicated region
      $region9: #{tpu_custom_call.1} parent=5 // pred_check
        _
      $region10: #{tpu_custom_call.1} parent=5 // pred_check_branch
        %168 = sbr.rel (%p165) target = $region12
      $region11: #{tpu_custom_call.1} parent=5 // pred_region
        %s169 = ssub.s32 %s14, 1
        // Predicated region
        $region13: #{tpu_custom_call.1} parent=11 // pred_check
          %p170 = pneg %p87
        $region14: #{tpu_custom_call.1} parent=11 // pred_check_branch
          %172 = sbr.rel (%p170) target = $region16
        $region15: #{tpu_custom_call.1} parent=11 // pred_region
          _
        $region16: #{tpu_custom_call.1} parent=11 // pred_fallthru
          _
        // Predicated region
        $region17: #{tpu_custom_call.1} parent=11 // pred_check
          %p173 = pneg %p108
        $region18: #{tpu_custom_call.1} parent=11 // pred_check_branch
          %175 = sbr.rel (%p173) target = $region20
        $region19: #{tpu_custom_call.1} parent=11 // pred_region
          _
        $region20: #{tpu_custom_call.1} parent=11 // pred_fallthru
          _
        // Predicated region
        $region21: #{tpu_custom_call.1} parent=11 // pred_check
          %p176 = pneg %p129
        $region22: #{tpu_custom_call.1} parent=11 // pred_check_branch
          %178 = sbr.rel (%p176) target = $region24
        $region23: #{tpu_custom_call.1} parent=11 // pred_region
          _
        $region24: #{tpu_custom_call.1} parent=11 // pred_fallthru
          _
      $region12: #{tpu_custom_call.1} parent=5 // pred_fallthru
        _
      %p179 = scmp.lt.s32.totalorder %s14, 2
      // Predicated region
      $region25: #{tpu_custom_call.1} parent=5 // pred_check
        %p180 = pneg %p179
      $region26: #{tpu_custom_call.1} parent=5 // pred_check_branch
        %182 = sbr.rel (%p180) target = $region28
      $region27: #{tpu_custom_call.1} parent=5 // pred_region
        // Predicated region
        $region29: #{tpu_custom_call.1} parent=27 // pred_check
          %p183 = pneg %p34
        $region30: #{tpu_custom_call.1} parent=27 // pred_check_branch
          %185 = sbr.rel (%p183) target = $region32
        $region31: #{tpu_custom_call.1} parent=27 // pred_region
          %p186 = scmp.lt.s32.totalorder %s14, 1
          %s187 = scalar_select %p186, %s14, 1
          %s188 = smul.addr %s187, 16
          %s189 = smul.addr %s188, 8
          %s190 = scalar_lea.vmem %s0, %s189
        $region32: #{tpu_custom_call.1} parent=27 // pred_fallthru
          _
        // Predicated region
        $region33: #{tpu_custom_call.1} parent=27 // pred_check
          %p191 = pneg %p60
        $region34: #{tpu_custom_call.1} parent=27 // pred_check_branch
          %193 = sbr.rel (%p191) target = $region36
        $region35: #{tpu_custom_call.1} parent=27 // pred_region
          %p194 = scmp.lt.s32.totalorder %s14, 1
          %s195 = scalar_select %p194, %s14, 1
          %s196 = smul.addr %s195, 16
          %s197 = smul.addr %s196, 4
          %s198 = scalar_lea.vmem %s1, %s197
        $region36: #{tpu_custom_call.1} parent=27 // pred_fallthru
          _
      $region28: #{tpu_custom_call.1} parent=5 // pred_fallthru
        _
      %p199 = scmp.le.s32.totalorder 1, %s14
      %p200 = scmp.lt.s32.totalorder %s14, 3
      %p201 = pnand %p199, %p200
      %p202 = pneg %p201
      // Predicated region
      $region37: #{tpu_custom_call.1} parent=5 // pred_check
        _
      $region38: #{tpu_custom_call.1} parent=5 // pred_check_branch
        %204 = sbr.rel (%p201) target = $region40
      $region39: #{tpu_custom_call.1} parent=5 // pred_region
        %s205 = ssub.s32 %s14, 1
        %p206 = scmp.lt.s32.totalorder %s19, 1
        %s207 = scalar_select %p206, %s19, 1
        %s208 = smul.addr %s207, 16
        %s209 = smul.addr %s208, 8
        %s210 = scalar_lea.vmem %s0, %s209
        %p211 = pneg %p40
        %p212 = pneg %p37
        %p213 = scmp.lt.s32.totalorder %s19, 1
        %s214 = scalar_select %p213, %s19, 1
        %s215 = smul.addr %s214, 16
        %s216 = smul.addr %s215, 4
        %s217 = scalar_lea.vmem %s1, %s216
        %p218 = pneg %p66
        %p219 = pneg %p63
        %p220 = pneg %p87
        %p221 = pneg %p84
        %p222 = pneg %p108
        %p223 = pneg %p105
        %p224 = pneg %p129
        %p225 = pneg %p126
        %p226 = pneg %p155
        %p227 = pneg %p152
        %s228 = sand.u32 %s142, 1
        %s229 = scalar_lea.sflag [#allocation3], %s228
        %s230 = sand.u32 %s142, 1
        %s231 = smul.addr %s230, 16
        %s232 = scalar_lea.vmem [#allocation2], %s231
        %p233 = scmp.lt.s32.totalorder %s19, 1
        %s234 = scalar_select %p233, %s19, 1
        %s235 = smul.addr %s234, 16
        %s236 = smul.addr %s235, 8
        %s237 = scalar_lea.vmem %s0, %s236
        %p238 = scmp.lt.s32.totalorder %s19, 1
        %s239 = scalar_select %p238, %s19, 1
        %s240 = smul.addr %s239, 16
        %s241 = smul.addr %s240, 4
        %s242 = scalar_lea.vmem %s1, %s241
        %v244 = vld [vmem:[%s237] sm:$0xff]
        %v245 = vld [vmem:[%s237 + $0x8] sm:$0xff]
        %v246 = vld [vmem:[%s237 + $0x10] sm:$0xff]
        %v247 = vld [vmem:[%s237 + $0x18] sm:$0xff]
        %v248 = vld [vmem:[%s237 + $0x20] sm:$0xff]
        %v249 = vld [vmem:[%s237 + $0x28] sm:$0xff]
        %v250 = vld [vmem:[%s237 + $0x30] sm:$0xff]
        %v251 = vld [vmem:[%s237 + $0x38] sm:$0xff]
        %v252 = vld [vmem:[%s237 + $0x40] sm:$0xff]
        %v253 = vld [vmem:[%s237 + $0x48] sm:$0xff]
        %v254 = vld [vmem:[%s237 + $0x50] sm:$0xff]
        %v255 = vld [vmem:[%s237 + $0x58] sm:$0xff]
        %v256 = vld [vmem:[%s237 + $0x60] sm:$0xff]
        %v257 = vld [vmem:[%s237 + $0x68] sm:$0xff]
        %v258 = vld [vmem:[%s237 + $0x70] sm:$0xff]
        %v259 = vld [vmem:[%s237 + $0x78] sm:$0xff]
        %v260 = vld [vmem:[%s242] sm:$0xf]
        %v261 = vld [vmem:[%s242 + $0x4] sm:$0xf]
        %v262 = vld [vmem:[%s242 + $0x8] sm:$0xf]
        %v263 = vld [vmem:[%s242 + $0xc] sm:$0xf]
        %v264 = vld [vmem:[%s242 + $0x10] sm:$0xf]
        %v265 = vld [vmem:[%s242 + $0x14] sm:$0xf]
        %v266 = vld [vmem:[%s242 + $0x18] sm:$0xf]
        %v267 = vld [vmem:[%s242 + $0x1c] sm:$0xf]
        %v268 = vld [vmem:[%s242 + $0x20] sm:$0xf]
        %v269 = vld [vmem:[%s242 + $0x24] sm:$0xf]
        %v270 = vld [vmem:[%s242 + $0x28] sm:$0xf]
        %v271 = vld [vmem:[%s242 + $0x2c] sm:$0xf]
        %v272 = vld [vmem:[%s242 + $0x30] sm:$0xf]
        %v273 = vld [vmem:[%s242 + $0x34] sm:$0xf]
        %v274 = vld [vmem:[%s242 + $0x38] sm:$0xf]
        %v275 = vld [vmem:[%s242 + $0x3c] sm:$0xf]
        %v276 = vld [vmem:[%s3] sm:$0x1]
        %278 = vset.pattern.permute.xlu0 0
        %279 = vperm.xlu0 %278, %v244
        %v280 = vpop.permute.xlu0 %279
        %283 = vset.pattern.permute.xlu0 0
        %284 = vperm.xlu0 %283, %v245
        %v285 = vpop.permute.xlu0 %284
        %288 = vset.pattern.permute.xlu0 0
        %289 = vperm.xlu0 %288, %v246
        %v290 = vpop.permute.xlu0 %289
        %293 = vset.pattern.permute.xlu0 0
        %294 = vperm.xlu0 %293, %v247
        %v295 = vpop.permute.xlu0 %294
        %298 = vset.pattern.permute.xlu0 0
        %299 = vperm.xlu0 %298, %v248
        %v300 = vpop.permute.xlu0 %299
        %303 = vset.pattern.permute.xlu0 0
        %304 = vperm.xlu0 %303, %v249
        %v305 = vpop.permute.xlu0 %304
        %308 = vset.pattern.permute.xlu0 0
        %309 = vperm.xlu0 %308, %v250
        %v310 = vpop.permute.xlu0 %309
        %313 = vset.pattern.permute.xlu0 0
        %314 = vperm.xlu0 %313, %v251
        %v315 = vpop.permute.xlu0 %314
        %318 = vset.pattern.permute.xlu0 0
        %319 = vperm.xlu0 %318, %v252
        %v320 = vpop.permute.xlu0 %319
        %323 = vset.pattern.permute.xlu0 0
        %324 = vperm.xlu0 %323, %v253
        %v325 = vpop.permute.xlu0 %324
        %328 = vset.pattern.permute.xlu0 0
        %329 = vperm.xlu0 %328, %v254
        %v330 = vpop.permute.xlu0 %329
        %333 = vset.pattern.permute.xlu0 0
        %334 = vperm.xlu0 %333, %v255
        %v335 = vpop.permute.xlu0 %334
        %338 = vset.pattern.permute.xlu0 0
        %339 = vperm.xlu0 %338, %v256
        %v340 = vpop.permute.xlu0 %339
        %343 = vset.pattern.permute.xlu0 0
        %344 = vperm.xlu0 %343, %v257
        %v345 = vpop.permute.xlu0 %344
        %348 = vset.pattern.permute.xlu0 0
        %349 = vperm.xlu0 %348, %v258
        %v350 = vpop.permute.xlu0 %349
        %353 = vset.pattern.permute.xlu0 0
        %354 = vperm.xlu0 %353, %v259
        %v355 = vpop.permute.xlu0 %354
        %v357 = vlaneseq
        %v358 = vshrl.u32 %v357, 7
        %v359 = vsub.s32 0, %v358
        %v360 = vrot.slane %v276, %v359
        %v361 = vmul.f32 %v280, %v360
        %v362 = vmul.f32 %v285, %v360
        %v363 = vmul.f32 %v290, %v360
        %v364 = vmul.f32 %v295, %v360
        %v365 = vmul.f32 %v300, %v360
        %v366 = vmul.f32 %v305, %v360
        %v367 = vmul.f32 %v310, %v360
        %v368 = vmul.f32 %v315, %v360
        %v369 = vmul.f32 %v320, %v360
        %v370 = vmul.f32 %v325, %v360
        %v371 = vmul.f32 %v330, %v360
        %v372 = vmul.f32 %v335, %v360
        %v373 = vmul.f32 %v340, %v360
        %v374 = vmul.f32 %v345, %v360
        %v375 = vmul.f32 %v350, %v360
        %v376 = vmul.f32 %v355, %v360
        %377 = vset.pattern.permute.xlu0 1
        %378 = vperm.xlu0 %377, %v244
        %v379 = vpop.permute.xlu0 %378
        %381 = vset.pattern.permute.xlu0 1
        %382 = vperm.xlu0 %381, %v245
        %v383 = vpop.permute.xlu0 %382
        %385 = vset.pattern.permute.xlu0 1
        %386 = vperm.xlu0 %385, %v246
        %v387 = vpop.permute.xlu0 %386
        %389 = vset.pattern.permute.xlu0 1
        %390 = vperm.xlu0 %389, %v247
        %v391 = vpop.permute.xlu0 %390
        %393 = vset.pattern.permute.xlu0 1
        %394 = vperm.xlu0 %393, %v248
        %v395 = vpop.permute.xlu0 %394
        %397 = vset.pattern.permute.xlu0 1
        %398 = vperm.xlu0 %397, %v249
        %v399 = vpop.permute.xlu0 %398
        %401 = vset.pattern.permute.xlu0 1
        %402 = vperm.xlu0 %401, %v250
        %v403 = vpop.permute.xlu0 %402
        %405 = vset.pattern.permute.xlu0 1
        %406 = vperm.xlu0 %405, %v251
        %v407 = vpop.permute.xlu0 %406
        %409 = vset.pattern.permute.xlu0 1
        %410 = vperm.xlu0 %409, %v252
        %v411 = vpop.permute.xlu0 %410
        %413 = vset.pattern.permute.xlu0 1
        %414 = vperm.xlu0 %413, %v253
        %v415 = vpop.permute.xlu0 %414
        %417 = vset.pattern.permute.xlu0 1
        %418 = vperm.xlu0 %417, %v254
        %v419 = vpop.permute.xlu0 %418
        %421 = vset.pattern.permute.xlu0 1
        %422 = vperm.xlu0 %421, %v255
        %v423 = vpop.permute.xlu0 %422
        %425 = vset.pattern.permute.xlu0 1
        %426 = vperm.xlu0 %425, %v256
        %v427 = vpop.permute.xlu0 %426
        %429 = vset.pattern.permute.xlu0 1
        %430 = vperm.xlu0 %429, %v257
        %v431 = vpop.permute.xlu0 %430
        %433 = vset.pattern.permute.xlu0 1
        %434 = vperm.xlu0 %433, %v258
        %v435 = vpop.permute.xlu0 %434
        %437 = vset.pattern.permute.xlu0 1
        %438 = vperm.xlu0 %437, %v259
        %v439 = vpop.permute.xlu0 %438
        %v441 = vmul.f32 %v379, %v360
        %v442 = vmul.f32 %v383, %v360
        %v443 = vmul.f32 %v387, %v360
        %v444 = vmul.f32 %v391, %v360
        %v445 = vmul.f32 %v395, %v360
        %v446 = vmul.f32 %v399, %v360
        %v447 = vmul.f32 %v403, %v360
        %v448 = vmul.f32 %v407, %v360
        %v449 = vmul.f32 %v411, %v360
        %v450 = vmul.f32 %v415, %v360
        %v451 = vmul.f32 %v419, %v360
        %v452 = vmul.f32 %v423, %v360
        %v453 = vmul.f32 %v427, %v360
        %v454 = vmul.f32 %v431, %v360
        %v455 = vmul.f32 %v435, %v360
        %v456 = vmul.f32 %v439, %v360
        %473 = vrot.lane.b32.xlu0 %v441, 96
        %v474 = vpop.permute.xlu0 %473
        %475 = vrot.lane.b32.xlu0 %v442, 96
        %v476 = vpop.permute.xlu0 %475
        %477 = vrot.lane.b32.xlu0 %v443, 96
        %v478 = vpop.permute.xlu0 %477
        %479 = vrot.lane.b32.xlu0 %v444, 96
        %v480 = vpop.permute.xlu0 %479
        %481 = vrot.lane.b32.xlu0 %v445, 96
        %v482 = vpop.permute.xlu0 %481
        %483 = vrot.lane.b32.xlu0 %v446, 96
        %v484 = vpop.permute.xlu0 %483
        %485 = vrot.lane.b32.xlu0 %v447, 96
        %v486 = vpop.permute.xlu0 %485
        %487 = vrot.lane.b32.xlu0 %v448, 96
        %v488 = vpop.permute.xlu0 %487
        %489 = vrot.lane.b32.xlu0 %v449, 96
        %v490 = vpop.permute.xlu0 %489
        %491 = vrot.lane.b32.xlu0 %v450, 96
        %v492 = vpop.permute.xlu0 %491
        %493 = vrot.lane.b32.xlu0 %v451, 96
        %v494 = vpop.permute.xlu0 %493
        %495 = vrot.lane.b32.xlu0 %v452, 96
        %v496 = vpop.permute.xlu0 %495
        %497 = vrot.lane.b32.xlu0 %v453, 96
        %v498 = vpop.permute.xlu0 %497
        %499 = vrot.lane.b32.xlu0 %v454, 96
        %v500 = vpop.permute.xlu0 %499
        %501 = vrot.lane.b32.xlu0 %v455, 96
        %v502 = vpop.permute.xlu0 %501
        %503 = vrot.lane.b32.xlu0 %v456, 96
        %v504 = vpop.permute.xlu0 %503
        %v521 = vadd.f32 %v361, %v474
        %v522 = vadd.f32 %v362, %v476
        %v523 = vadd.f32 %v363, %v478
        %v524 = vadd.f32 %v364, %v480
        %v525 = vadd.f32 %v365, %v482
        %v526 = vadd.f32 %v366, %v484
        %v527 = vadd.f32 %v367, %v486
        %v528 = vadd.f32 %v368, %v488
        %v529 = vadd.f32 %v369, %v490
        %v530 = vadd.f32 %v370, %v492
        %v531 = vadd.f32 %v371, %v494
        %v532 = vadd.f32 %v372, %v496
        %v533 = vadd.f32 %v373, %v498
        %v534 = vadd.f32 %v374, %v500
        %v535 = vadd.f32 %v375, %v502
        %v536 = vadd.f32 %v376, %v504
        %538 = vrot.lane.b32.xlu0 %v360, 64
        %v539 = vpop.permute.xlu0 %538
        %v541 = vadd.f32 %v521, %v539
        %v542 = vadd.f32 %v522, %v539
        %v543 = vadd.f32 %v523, %v539
        %v544 = vadd.f32 %v524, %v539
        %v545 = vadd.f32 %v525, %v539
        %v546 = vadd.f32 %v526, %v539
        %v547 = vadd.f32 %v527, %v539
        %v548 = vadd.f32 %v528, %v539
        %v549 = vadd.f32 %v529, %v539
        %v550 = vadd.f32 %v530, %v539
        %v551 = vadd.f32 %v531, %v539
        %v552 = vadd.f32 %v532, %v539
        %v553 = vadd.f32 %v533, %v539
        %v554 = vadd.f32 %v534, %v539
        %v555 = vadd.f32 %v535, %v539
        %v556 = vadd.f32 %v536, %v539
        %v557 = vmax.f32 %v541, 0.0
        %v558 = vmax.f32 %v542, 0.0
        %v559 = vmax.f32 %v543, 0.0
        %v560 = vmax.f32 %v544, 0.0
        %v561 = vmax.f32 %v545, 0.0
        %v562 = vmax.f32 %v546, 0.0
        %v563 = vmax.f32 %v547, 0.0
        %v564 = vmax.f32 %v548, 0.0
        %v565 = vmax.f32 %v549, 0.0
        %v566 = vmax.f32 %v550, 0.0
        %v567 = vmax.f32 %v551, 0.0
        %v568 = vmax.f32 %v552, 0.0
        %v569 = vmax.f32 %v553, 0.0
        %v570 = vmax.f32 %v554, 0.0
        %v571 = vmax.f32 %v555, 0.0
        %v572 = vmax.f32 %v556, 0.0
        %v573 = vld [vmem:[%s2] sm:$0xff]
        %v574 = vld [vmem:[%s2 + $0x8] sm:$0xff]
        %v575 = vld [vmem:[%s2 + $0x10] sm:$0xff]
        %v576 = vld [vmem:[%s2 + $0x18] sm:$0xff]
        %v577 = vpack.c.bf16 %v574, %v573
        %v578 = vpack.c.bf16 %v576, %v575
        %v579 = vld [vmem:[%s3 + $0x1] sm:$0x1]
        %v580 = vpack.c.bf16 %v558, %v557
        %v581 = vpack.c.bf16 %v560, %v559
        %v582 = vpack.c.bf16 %v562, %v561
        %v583 = vpack.c.bf16 %v564, %v563
        %v584 = vpack.c.bf16 %v566, %v565
        %v585 = vpack.c.bf16 %v568, %v567
        %v586 = vpack.c.bf16 %v570, %v569
        %v587 = vpack.c.bf16 %v572, %v571
        %vm588 = vcmask 261120
        %v590 = vsel %vm588, %v580, 0
        %v593 = vsel %vm588, %v581, 0
        %v596 = vsel %vm588, %v582, 0
        %v599 = vsel %vm588, %v583, 0
        %v602 = vsel %vm588, %v584, 0
        %v605 = vsel %vm588, %v585, 0
        %v608 = vsel %vm588, %v586, 0
        %v611 = vsel %vm588, %v587, 0
        %613 = vmatprep.subr.bf16.mxu0 0
        %614 = vmatpush1.bf16.msra.mxu0 %v577
        %615 = vmatprep.subr.bf16.mxu0 0
        %616 = vmatpush1.bf16.msra.mxu0 %v578
        %617 = vmatprep.subr.bf16.mxu0 0
        %618 = vmatpush1.bf16.msra.mxu0 0
        %619 = vmatprep.subr.bf16.mxu0 0
        %620 = vmatpush1.bf16.msra.mxu0 0
        %621 = vmatprep.subr.bf16.mxu0 0
        %622 = vmatpush1.bf16.msra.mxu0 0
        %623 = vmatprep.subr.bf16.mxu0 0
        %624 = vmatpush1.bf16.msra.mxu0 0
        %625 = vmatprep.subr.bf16.mxu0 0
        %626 = vmatpush1.bf16.msra.mxu0 0
        %627 = vmatprep.subr.bf16.mxu0 0
        %628 = vmatpush1.bf16.msra.mxu0 0
        %629 = vmatprep.subr.bf16.mxu0 0
        %630 = vmatpush1.bf16.msra.mxu0 0
        %631 = vmatprep.subr.bf16.mxu0 0
        %632 = vmatpush1.bf16.msra.mxu0 0
        %633 = vmatprep.subr.bf16.mxu0 0
        %634 = vmatpush1.bf16.msra.mxu0 0
        %635 = vmatprep.subr.bf16.mxu0 0
        %636 = vmatpush1.bf16.msra.mxu0 0
        %637 = vmatprep.subr.bf16.mxu0 0
        %638 = vmatpush1.bf16.msra.mxu0 0
        %639 = vmatprep.subr.bf16.mxu0 0
        %640 = vmatpush1.bf16.msra.mxu0 0
        %641 = vmatprep.subr.bf16.mxu0 0
        %642 = vmatpush1.bf16.msra.mxu0 0
        %643 = vmatprep.subr.bf16.mxu0 0
        %644 = vmatpush1.bf16.msra.mxu0 0
        %645 = vmatprep.mubr.bf16.mxu0 0
        %646 = vmatmul.mubr.bf16.gmra.mrb[0].mxu0 %v590
        %v647 = vpop.f32.mrb[0].mxu0
        %v648 = vadd.f32 0.0, %v647
        %v649 = vpop.f32.mrb[0].mxu0
        %v650 = vpop.f32.mrb[0].mxu0
        %v651 = vadd.f32 0.0, %v650
        %v652 = vpop.f32.mrb[0].mxu0
        %653 = vmatprep.mubr.bf16.mxu0 0
        %654 = vmatmul.mubr.bf16.gmra.mrb[0].mxu0 %v593
        %v655 = vpop.f32.mrb[0].mxu0
        %v656 = vadd.f32 0.0, %v655
        %v657 = vpop.f32.mrb[0].mxu0
        %v658 = vpop.f32.mrb[0].mxu0
        %v659 = vadd.f32 0.0, %v658
        %v660 = vpop.f32.mrb[0].mxu0
        %661 = vmatprep.mubr.bf16.mxu0 0
        %662 = vmatmul.mubr.bf16.gmra.mrb[0].mxu0 %v596
        %v663 = vpop.f32.mrb[0].mxu0
        %v664 = vadd.f32 0.0, %v663
        %v665 = vpop.f32.mrb[0].mxu0
        %v666 = vpop.f32.mrb[0].mxu0
        %v667 = vadd.f32 0.0, %v666
        %v668 = vpop.f32.mrb[0].mxu0
        %669 = vmatprep.mubr.bf16.mxu0 0
        %670 = vmatmul.mubr.bf16.gmra.mrb[0].mxu0 %v599
        %v671 = vpop.f32.mrb[0].mxu0
        %v672 = vadd.f32 0.0, %v671
        %v673 = vpop.f32.mrb[0].mxu0
        %v674 = vpop.f32.mrb[0].mxu0
        %v675 = vadd.f32 0.0, %v674
        %v676 = vpop.f32.mrb[0].mxu0
        %677 = vmatprep.mubr.bf16.mxu0 0
        %678 = vmatmul.mubr.bf16.gmra.mrb[0].mxu0 %v602
        %v679 = vpop.f32.mrb[0].mxu0
        %v680 = vadd.f32 0.0, %v679
        %v681 = vpop.f32.mrb[0].mxu0
        %v682 = vpop.f32.mrb[0].mxu0
        %v683 = vadd.f32 0.0, %v682
        %v684 = vpop.f32.mrb[0].mxu0
        %685 = vmatprep.mubr.bf16.mxu0 0
        %686 = vmatmul.mubr.bf16.gmra.mrb[0].mxu0 %v605
        %v687 = vpop.f32.mrb[0].mxu0
        %v688 = vadd.f32 0.0, %v687
        %v689 = vpop.f32.mrb[0].mxu0
        %v690 = vpop.f32.mrb[0].mxu0
        %v691 = vadd.f32 0.0, %v690
        %v692 = vpop.f32.mrb[0].mxu0
        %693 = vmatprep.mubr.bf16.mxu0 0
        %694 = vmatmul.mubr.bf16.gmra.mrb[0].mxu0 %v608
        %v695 = vpop.f32.mrb[0].mxu0
        %v696 = vadd.f32 0.0, %v695
        %v697 = vpop.f32.mrb[0].mxu0
        %v698 = vpop.f32.mrb[0].mxu0
        %v699 = vadd.f32 0.0, %v698
        %v700 = vpop.f32.mrb[0].mxu0
        %701 = vmatprep.mubr.bf16.mxu0 0
        %702 = vmatmul.mubr.bf16.gmra.mrb[0].mxu0 %v611
        %v703 = vpop.f32.mrb[0].mxu0
        %v704 = vadd.f32 0.0, %v703
        %v705 = vpop.f32.mrb[0].mxu0
        %v706 = vpop.f32.mrb[0].mxu0
        %v707 = vadd.f32 0.0, %v706
        %v708 = vpop.f32.mrb[0].mxu0
        %709 = vdwg.mxu0
        %v710 = vpack.c.bf16 %v651, %v648
        %v711 = vpack.c.bf16 %v659, %v656
        %v712 = vpack.c.bf16 %v667, %v664
        %v713 = vpack.c.bf16 %v675, %v672
        %v714 = vpack.c.bf16 %v683, %v680
        %v715 = vpack.c.bf16 %v691, %v688
        %v716 = vpack.c.bf16 %v699, %v696
        %v717 = vpack.c.bf16 %v707, %v704
        %v718 = vlaneseq
        %v719 = vshrl.u32 %v718, 7
        %v720 = vsub.s32 0, %v719
        %v721 = vrot.slane %v579, %v720
        %v738 = vunpack.c.l.b16 %v260
        %v739 = vunpack.c.l.b16 %v261
        %v740 = vunpack.c.l.b16 %v262
        %v741 = vunpack.c.l.b16 %v263
        %v742 = vunpack.c.l.b16 %v264
        %v743 = vunpack.c.l.b16 %v265
        %v744 = vunpack.c.l.b16 %v266
        %v745 = vunpack.c.l.b16 %v267
        %v746 = vunpack.c.l.b16 %v268
        %v747 = vunpack.c.l.b16 %v269
        %v748 = vunpack.c.l.b16 %v270
        %v749 = vunpack.c.l.b16 %v271
        %v750 = vunpack.c.l.b16 %v272
        %v751 = vunpack.c.l.b16 %v273
        %v752 = vunpack.c.l.b16 %v274
        %v753 = vunpack.c.l.b16 %v275
        %v754 = vpack.c.b16 %v739, %v738
        %v755 = vpack.c.b16 %v741, %v740
        %v756 = vpack.c.b16 %v743, %v742
        %v757 = vpack.c.b16 %v745, %v744
        %v758 = vpack.c.b16 %v747, %v746
        %v759 = vpack.c.b16 %v749, %v748
        %v760 = vpack.c.b16 %v751, %v750
        %v761 = vpack.c.b16 %v753, %v752
        %770 = vmatprep.subr.bf16.mxu0 0
        %771 = vmatpush1.bf16.msra.mxu0 %v710
        %772 = vmatprep.subr.bf16.mxu0 0
        %773 = vmatpush1.bf16.msra.mxu0 %v711
        %774 = vmatprep.subr.bf16.mxu0 0
        %775 = vmatpush1.bf16.msra.mxu0 %v712
        %776 = vmatprep.subr.bf16.mxu0 0
        %777 = vmatpush1.bf16.msra.mxu0 %v713
        %778 = vmatprep.subr.bf16.mxu0 0
        %779 = vmatpush1.bf16.msra.mxu0 %v714
        %780 = vmatprep.subr.bf16.mxu0 0
        %781 = vmatpush1.bf16.msra.mxu0 %v715
        %782 = vmatprep.subr.bf16.mxu0 0
        %783 = vmatpush1.bf16.msra.mxu0 %v716
        %784 = vmatprep.subr.bf16.mxu0 0
        %785 = vmatpush1.bf16.msra.mxu0 %v717
        %786 = vmatprep.subr.bf16.mxu0 0
        %787 = vmatpush1.bf16.msra.mxu0 0
        %788 = vmatprep.subr.bf16.mxu0 0
        %789 = vmatpush1.bf16.msra.mxu0 0
        %790 = vmatprep.subr.bf16.mxu0 0
        %791 = vmatpush1.bf16.msra.mxu0 0
        %792 = vmatprep.subr.bf16.mxu0 0
        %793 = vmatpush1.bf16.msra.mxu0 0
        %794 = vmatprep.subr.bf16.mxu0 0
        %795 = vmatpush1.bf16.msra.mxu0 0
        %796 = vmatprep.subr.bf16.mxu0 0
        %797 = vmatpush1.bf16.msra.mxu0 0
        %798 = vmatprep.subr.bf16.mxu0 0
        %799 = vmatpush1.bf16.msra.mxu0 0
        %800 = vmatprep.subr.bf16.mxu0 0
        %801 = vmatpush1.bf16.msra.mxu0 0
        %802 = vmatprep.mubr.bf16.mxu0 0
        %803 = vmatmul.mubr.bf16.gmra.mrb[0].mxu0 %v754
        %v804 = vpop.f32.mrb[0].mxu0
        %v805 = vadd.f32 %v721, %v804
        %v806 = vpop.f32.mrb[0].mxu0
        %v807 = vpop.f32.mrb[0].mxu0
        %v808 = vadd.f32 %v721, %v807
        %v809 = vpop.f32.mrb[0].mxu0
        %810 = vmatprep.mubr.bf16.mxu0 0
        %811 = vmatmul.mubr.bf16.gmra.mrb[0].mxu0 %v755
        %v812 = vpop.f32.mrb[0].mxu0
        %v813 = vadd.f32 %v721, %v812
        %v814 = vpop.f32.mrb[0].mxu0
        %v815 = vpop.f32.mrb[0].mxu0
        %v816 = vadd.f32 %v721, %v815
        %v817 = vpop.f32.mrb[0].mxu0
        %818 = vmatprep.mubr.bf16.mxu0 0
        %819 = vmatmul.mubr.bf16.gmra.mrb[0].mxu0 %v756
        %v820 = vpop.f32.mrb[0].mxu0
        %v821 = vadd.f32 %v721, %v820
        %v822 = vpop.f32.mrb[0].mxu0
        %v823 = vpop.f32.mrb[0].mxu0
        %v824 = vadd.f32 %v721, %v823
        %v825 = vpop.f32.mrb[0].mxu0
        %826 = vmatprep.mubr.bf16.mxu0 0
        %827 = vmatmul.mubr.bf16.gmra.mrb[0].mxu0 %v757
        %v828 = vpop.f32.mrb[0].mxu0
        %v829 = vadd.f32 %v721, %v828
        %v830 = vpop.f32.mrb[0].mxu0
        %v831 = vpop.f32.mrb[0].mxu0
        %v832 = vadd.f32 %v721, %v831
        %v833 = vpop.f32.mrb[0].mxu0
        %834 = vmatprep.mubr.bf16.mxu0 0
        %835 = vmatmul.mubr.bf16.gmra.mrb[0].mxu0 %v758
        %v836 = vpop.f32.mrb[0].mxu0
        %v837 = vadd.f32 %v721, %v836
        %v838 = vpop.f32.mrb[0].mxu0
        %v839 = vpop.f32.mrb[0].mxu0
        %v840 = vadd.f32 %v721, %v839
        %v841 = vpop.f32.mrb[0].mxu0
        %842 = vmatprep.mubr.bf16.mxu0 0
        %843 = vmatmul.mubr.bf16.gmra.mrb[0].mxu0 %v759
        %v844 = vpop.f32.mrb[0].mxu0
        %v845 = vadd.f32 %v721, %v844
        %v846 = vpop.f32.mrb[0].mxu0
        %v847 = vpop.f32.mrb[0].mxu0
        %v848 = vadd.f32 %v721, %v847
        %v849 = vpop.f32.mrb[0].mxu0
        %850 = vmatprep.mubr.bf16.mxu0 0
        %851 = vmatmul.mubr.bf16.gmra.mrb[0].mxu0 %v760
        %v852 = vpop.f32.mrb[0].mxu0
        %v853 = vadd.f32 %v721, %v852
        %v854 = vpop.f32.mrb[0].mxu0
        %v855 = vpop.f32.mrb[0].mxu0
        %v856 = vadd.f32 %v721, %v855
        %v857 = vpop.f32.mrb[0].mxu0
        %858 = vmatprep.mubr.bf16.mxu0 0
        %859 = vmatmul.mubr.bf16.gmra.mrb[0].mxu0 %v761
        %v860 = vpop.f32.mrb[0].mxu0
        %v861 = vadd.f32 %v721, %v860
        %v862 = vpop.f32.mrb[0].mxu0
        %v863 = vpop.f32.mrb[0].mxu0
        %v864 = vadd.f32 %v721, %v863
        %v865 = vpop.f32.mrb[0].mxu0
        %866 = vdwg.mxu0
        %v867 = vmax.f32 %v805, 0.0
        %v868 = vmax.f32 %v808, 0.0
        %v869 = vmax.f32 %v813, 0.0
        %v870 = vmax.f32 %v816, 0.0
        %v871 = vmax.f32 %v821, 0.0
        %v872 = vmax.f32 %v824, 0.0
        %v873 = vmax.f32 %v829, 0.0
        %v874 = vmax.f32 %v832, 0.0
        %v875 = vmax.f32 %v837, 0.0
        %v876 = vmax.f32 %v840, 0.0
        %v877 = vmax.f32 %v845, 0.0
        %v878 = vmax.f32 %v848, 0.0
        %v879 = vmax.f32 %v853, 0.0
        %v880 = vmax.f32 %v856, 0.0
        %v881 = vmax.f32 %v861, 0.0
        %v882 = vmax.f32 %v864, 0.0
        %v883 = vsel %vm588, %v867, 0.0
        %v884 = vsel %vm588, %v868, 0.0
        %v885 = vadd.f32 %v883, %v884
        %v886 = vrot.slane %v885, 4
        %v887 = vadd.f32 %v885, %v886
        %v888 = vrot.slane %v887, 2
        %v889 = vadd.f32 %v887, %v888
        %v890 = vrot.slane %v889, 1
        %v891 = vadd.f32 %v889, %v890
        %v892 = vsel %vm588, %v869, 0.0
        %v893 = vsel %vm588, %v870, 0.0
        %v894 = vadd.f32 %v892, %v893
        %v895 = vrot.slane %v894, 4
        %v896 = vadd.f32 %v894, %v895
        %v897 = vrot.slane %v896, 2
        %v898 = vadd.f32 %v896, %v897
        %v899 = vrot.slane %v898, 1
        %v900 = vadd.f32 %v898, %v899
        %v901 = vsel %vm588, %v871, 0.0
        %v902 = vsel %vm588, %v872, 0.0
        %v903 = vadd.f32 %v901, %v902
        %v904 = vrot.slane %v903, 4
        %v905 = vadd.f32 %v903, %v904
        %v906 = vrot.slane %v905, 2
        %v907 = vadd.f32 %v905, %v906
        %v908 = vrot.slane %v907, 1
        %v909 = vadd.f32 %v907, %v908
        %v910 = vsel %vm588, %v873, 0.0
        %v911 = vsel %vm588, %v874, 0.0
        %v912 = vadd.f32 %v910, %v911
        %v913 = vrot.slane %v912, 4
        %v914 = vadd.f32 %v912, %v913
        %v915 = vrot.slane %v914, 2
        %v916 = vadd.f32 %v914, %v915
        %v917 = vrot.slane %v916, 1
        %v918 = vadd.f32 %v916, %v917
        %v919 = vsel %vm588, %v875, 0.0
        %v920 = vsel %vm588, %v876, 0.0
        %v921 = vadd.f32 %v919, %v920
        %v922 = vrot.slane %v921, 4
        %v923 = vadd.f32 %v921, %v922
        %v924 = vrot.slane %v923, 2
        %v925 = vadd.f32 %v923, %v924
        %v926 = vrot.slane %v925, 1
        %v927 = vadd.f32 %v925, %v926
        %v928 = vsel %vm588, %v877, 0.0
        %v929 = vsel %vm588, %v878, 0.0
        %v930 = vadd.f32 %v928, %v929
        %v931 = vrot.slane %v930, 4
        %v932 = vadd.f32 %v930, %v931
        %v933 = vrot.slane %v932, 2
        %v934 = vadd.f32 %v932, %v933
        %v935 = vrot.slane %v934, 1
        %v936 = vadd.f32 %v934, %v935
        %v937 = vsel %vm588, %v879, 0.0
        %v938 = vsel %vm588, %v880, 0.0
        %v939 = vadd.f32 %v937, %v938
        %v940 = vrot.slane %v939, 4
        %v941 = vadd.f32 %v939, %v940
        %v942 = vrot.slane %v941, 2
        %v943 = vadd.f32 %v941, %v942
        %v944 = vrot.slane %v943, 1
        %v945 = vadd.f32 %v943, %v944
        %v946 = vsel %vm588, %v881, 0.0
        %v947 = vsel %vm588, %v882, 0.0
        %v948 = vadd.f32 %v946, %v947
        %v949 = vrot.slane %v948, 4
        %v950 = vadd.f32 %v948, %v949
        %v951 = vrot.slane %v950, 2
        %v952 = vadd.f32 %v950, %v951
        %v953 = vrot.slane %v952, 1
        %v954 = vadd.f32 %v952, %v953
        %v955 = vrcp.pop 16.0
        %v956 = vmul.f32 %v891, %v955
        %v957 = vmul.f32 %v900, %v955
        %v958 = vmul.f32 %v909, %v955
        %v959 = vmul.f32 %v918, %v955
        %v960 = vmul.f32 %v927, %v955
        %v961 = vmul.f32 %v936, %v955
        %v962 = vmul.f32 %v945, %v955
        %v963 = vmul.f32 %v954, %v955
        %v964 = vsub.f32 %v867, %v956
        %v965 = vsub.f32 %v868, %v956
        %v966 = vsub.f32 %v869, %v957
        %v967 = vsub.f32 %v870, %v957
        %v968 = vsub.f32 %v871, %v958
        %v969 = vsub.f32 %v872, %v958
        %v970 = vsub.f32 %v873, %v959
        %v971 = vsub.f32 %v874, %v959
        %v972 = vsub.f32 %v875, %v960
        %v973 = vsub.f32 %v876, %v960
        %v974 = vsub.f32 %v877, %v961
        %v975 = vsub.f32 %v878, %v961
        %v976 = vsub.f32 %v879, %v962
        %v977 = vsub.f32 %v880, %v962
        %v978 = vsub.f32 %v881, %v963
        %v979 = vsub.f32 %v882, %v963
        %v980 = vmul.f32 %v964, %v964
        %v981 = vmul.f32 %v965, %v965
        %v982 = vmul.f32 %v966, %v966
        %v983 = vmul.f32 %v967, %v967
        %v984 = vmul.f32 %v968, %v968
        %v985 = vmul.f32 %v969, %v969
        %v986 = vmul.f32 %v970, %v970
        %v987 = vmul.f32 %v971, %v971
        %v988 = vmul.f32 %v972, %v972
        %v989 = vmul.f32 %v973, %v973
        %v990 = vmul.f32 %v974, %v974
        %v991 = vmul.f32 %v975, %v975
        %v992 = vmul.f32 %v976, %v976
        %v993 = vmul.f32 %v977, %v977
        %v994 = vmul.f32 %v978, %v978
        %v995 = vmul.f32 %v979, %v979
        %v996 = vsel %vm588, %v980, 0.0
        %997 = vadd.xlane.f32.xlu0 %v996
        %v998 = vpop.xlane.xlu0 %997
        %v999 = vsel %vm588, %v981, 0.0
        %1000 = vadd.xlane.f32.xlu0 %v999
        %v1001 = vpop.xlane.xlu0 %1000
        %v1002 = vsel %vm588, %v982, 0.0
        %1003 = vadd.xlane.f32.xlu0 %v1002
        %v1004 = vpop.xlane.xlu0 %1003
        %v1005 = vsel %vm588, %v983, 0.0
        %1006 = vadd.xlane.f32.xlu0 %v1005
        %v1007 = vpop.xlane.xlu0 %1006
        %v1008 = vsel %vm588, %v984, 0.0
        %1009 = vadd.xlane.f32.xlu0 %v1008
        %v1010 = vpop.xlane.xlu0 %1009
        %v1011 = vsel %vm588, %v985, 0.0
        %1012 = vadd.xlane.f32.xlu0 %v1011
        %v1013 = vpop.xlane.xlu0 %1012
        %v1014 = vsel %vm588, %v986, 0.0
        %1015 = vadd.xlane.f32.xlu0 %v1014
        %v1016 = vpop.xlane.xlu0 %1015
        %v1017 = vsel %vm588, %v987, 0.0
        %1018 = vadd.xlane.f32.xlu0 %v1017
        %v1019 = vpop.xlane.xlu0 %1018
        %v1020 = vsel %vm588, %v988, 0.0
        %1021 = vadd.xlane.f32.xlu0 %v1020
        %v1022 = vpop.xlane.xlu0 %1021
        %v1023 = vsel %vm588, %v989, 0.0
        %1024 = vadd.xlane.f32.xlu0 %v1023
        %v1025 = vpop.xlane.xlu0 %1024
        %v1026 = vsel %vm588, %v990, 0.0
        %1027 = vadd.xlane.f32.xlu0 %v1026
        %v1028 = vpop.xlane.xlu0 %1027
        %v1029 = vsel %vm588, %v991, 0.0
        %1030 = vadd.xlane.f32.xlu0 %v1029
        %v1031 = vpop.xlane.xlu0 %1030
        %v1032 = vsel %vm588, %v992, 0.0
        %1033 = vadd.xlane.f32.xlu0 %v1032
        %v1034 = vpop.xlane.xlu0 %1033
        %v1035 = vsel %vm588, %v993, 0.0
        %1036 = vadd.xlane.f32.xlu0 %v1035
        %v1037 = vpop.xlane.xlu0 %1036
        %v1038 = vsel %vm588, %v994, 0.0
        %1039 = vadd.xlane.f32.xlu0 %v1038
        %v1040 = vpop.xlane.xlu0 %1039
        %v1041 = vsel %vm588, %v995, 0.0
        %1042 = vadd.xlane.f32.xlu0 %v1041
        %v1043 = vpop.xlane.xlu0 %1042
        %v1060 = vlaneseq
        %v1061 = vand.u32 %v1060, 127
        %v1062 = vlaneseq
        %v1063 = vshrl.u32 %v1062, 7
        %v1064 = vsub.s32 %v1061, %v1063
        %v1065 = vrot.slane %v998, %v1064
        %v1066 = vadd.s32 %v1061, 4294967288
        %v1067 = vlaneseq
        %v1068 = vshrl.u32 %v1067, 7
        %v1069 = vsub.s32 %v1066, %v1068
        %v1070 = vrot.slane %v1001, %v1069
        %vm1071 = vcmask 130112
        %v1072 = vsel %vm1071, %v1070, %v1065
        %v1073 = vlaneseq
        %v1074 = vshrl.u32 %v1073, 7
        %v1075 = vsub.s32 %v1061, %v1074
        %v1076 = vrot.slane %v1004, %v1075
        %v1077 = vlaneseq
        %v1078 = vshrl.u32 %v1077, 7
        %v1079 = vsub.s32 %v1066, %v1078
        %v1080 = vrot.slane %v1007, %v1079
        %v1081 = vsel %vm1071, %v1080, %v1076
        %v1082 = vlaneseq
        %v1083 = vshrl.u32 %v1082, 7
        %v1084 = vsub.s32 %v1061, %v1083
        %v1085 = vrot.slane %v1010, %v1084
        %v1086 = vlaneseq
        %v1087 = vshrl.u32 %v1086, 7
        %v1088 = vsub.s32 %v1066, %v1087
        %v1089 = vrot.slane %v1013, %v1088
        %v1090 = vsel %vm1071, %v1089, %v1085
        %v1091 = vlaneseq
        %v1092 = vshrl.u32 %v1091, 7
        %v1093 = vsub.s32 %v1061, %v1092
        %v1094 = vrot.slane %v1016, %v1093
        %v1095 = vlaneseq
        %v1096 = vshrl.u32 %v1095, 7
        %v1097 = vsub.s32 %v1066, %v1096
        %v1098 = vrot.slane %v1019, %v1097
        %v1099 = vsel %vm1071, %v1098, %v1094
        %v1100 = vlaneseq
        %v1101 = vshrl.u32 %v1100, 7
        %v1102 = vsub.s32 %v1061, %v1101
        %v1103 = vrot.slane %v1022, %v1102
        %v1104 = vlaneseq
        %v1105 = vshrl.u32 %v1104, 7
        %v1106 = vsub.s32 %v1066, %v1105
        %v1107 = vrot.slane %v1025, %v1106
        %v1108 = vsel %vm1071, %v1107, %v1103
        %v1109 = vlaneseq
        %v1110 = vshrl.u32 %v1109, 7
        %v1111 = vsub.s32 %v1061, %v1110
        %v1112 = vrot.slane %v1028, %v1111
        %v1113 = vlaneseq
        %v1114 = vshrl.u32 %v1113, 7
        %v1115 = vsub.s32 %v1066, %v1114
        %v1116 = vrot.slane %v1031, %v1115
        %v1117 = vsel %vm1071, %v1116, %v1112
        %v1118 = vlaneseq
        %v1119 = vshrl.u32 %v1118, 7
        %v1120 = vsub.s32 %v1061, %v1119
        %v1121 = vrot.slane %v1034, %v1120
        %v1122 = vlaneseq
        %v1123 = vshrl.u32 %v1122, 7
        %v1124 = vsub.s32 %v1066, %v1123
        %v1125 = vrot.slane %v1037, %v1124
        %v1126 = vsel %vm1071, %v1125, %v1121
        %v1127 = vlaneseq
        %v1128 = vshrl.u32 %v1127, 7
        %v1129 = vsub.s32 %v1061, %v1128
        %v1130 = vrot.slane %v1040, %v1129
        %v1131 = vlaneseq
        %v1132 = vshrl.u32 %v1131, 7
        %v1133 = vsub.s32 %v1066, %v1132
        %v1134 = vrot.slane %v1043, %v1133
        %v1135 = vsel %vm1071, %v1134, %v1130
        %vm1136 = vcmask 1041409
        %v1137 = vsel %vm1136, %v1081, %v1072
        %vm1138 = vcmask 1042434
        %v1139 = vsel %vm1138, %v1090, %v1137
        %vm1140 = vcmask 1043459
        %v1141 = vsel %vm1140, %v1099, %v1139
        %vm1142 = vcmask 1044484
        %v1143 = vsel %vm1142, %v1108, %v1141
        %vm1144 = vcmask 1045509
        %v1145 = vsel %vm1144, %v1117, %v1143
        %vm1146 = vcmask 1046534
        %v1147 = vsel %vm1146, %v1126, %v1145
        %vm1148 = vcmask 1047559
        %v1149 = vsel %vm1148, %v1135, %v1147
        %vm1151 = vcmask 130048
        %v1152 = vsel %vm1151, %v1149, 0.0
        %1153 = vadd.xlane.f32.xlu0 %v1152
        %v1154 = vpop.xlane.xlu0 %1153
        %v1155 = vmul.f32 %v1154, %v955
        %v1156 = vadd.f32 %v1155, 1e-05
        %v1157 = vrsqrt.pop %v1156
        %v1159 = vlaneseq
        %v1160 = vshrl.u32 %v1159, 7
        %v1161 = vsub.s32 0, %v1160
        %v1162 = vrot.slane %v1157, %v1161
        %v1163 = vlaneseq
        %v1164 = vshrl.u32 %v1163, 7
        %v1165 = vsub.s32 1, %v1164
        %v1166 = vrot.slane %v1157, %v1165
        %v1167 = vlaneseq
        %v1168 = vshrl.u32 %v1167, 7
        %v1169 = vsub.s32 2, %v1168
        %v1170 = vrot.slane %v1157, %v1169
        %v1171 = vlaneseq
        %v1172 = vshrl.u32 %v1171, 7
        %v1173 = vsub.s32 3, %v1172
        %v1174 = vrot.slane %v1157, %v1173
        %v1175 = vlaneseq
        %v1176 = vshrl.u32 %v1175, 7
        %v1177 = vsub.s32 4, %v1176
        %v1178 = vrot.slane %v1157, %v1177
        %v1179 = vlaneseq
        %v1180 = vshrl.u32 %v1179, 7
        %v1181 = vsub.s32 5, %v1180
        %v1182 = vrot.slane %v1157, %v1181
        %v1183 = vlaneseq
        %v1184 = vshrl.u32 %v1183, 7
        %v1185 = vsub.s32 6, %v1184
        %v1186 = vrot.slane %v1157, %v1185
        %v1187 = vlaneseq
        %v1188 = vshrl.u32 %v1187, 7
        %v1189 = vsub.s32 7, %v1188
        %v1190 = vrot.slane %v1157, %v1189
        %v1199 = vmul.f32 %v1162, %v964
        %v1200 = vmul.f32 %v1162, %v965
        %v1201 = vmul.f32 %v1166, %v966
        %v1202 = vmul.f32 %v1166, %v967
        %v1203 = vmul.f32 %v1170, %v968
        %v1204 = vmul.f32 %v1170, %v969
        %v1205 = vmul.f32 %v1174, %v970
        %v1206 = vmul.f32 %v1174, %v971
        %v1207 = vmul.f32 %v1178, %v972
        %v1208 = vmul.f32 %v1178, %v973
        %v1209 = vmul.f32 %v1182, %v974
        %v1210 = vmul.f32 %v1182, %v975
        %v1211 = vmul.f32 %v1186, %v976
        %v1212 = vmul.f32 %v1186, %v977
        %v1213 = vmul.f32 %v1190, %v978
        %v1214 = vmul.f32 %v1190, %v979
        %v1215 = vpack.c.bf16 %v1200, %v1199
        %v1216 = vpack.c.bf16 %v1202, %v1201
        %v1217 = vpack.c.bf16 %v1204, %v1203
        %v1218 = vpack.c.bf16 %v1206, %v1205
        %v1219 = vpack.c.bf16 %v1208, %v1207
        %v1220 = vpack.c.bf16 %v1210, %v1209
        %v1221 = vpack.c.bf16 %v1212, %v1211
        %v1222 = vpack.c.bf16 %v1214, %v1213
        %1225 = vrot.lane.b32.xlu0 %v577, 96
        %v1226 = vpop.permute.xlu0 %1225
        %1227 = vrot.lane.b32.xlu0 %v578, 96
        %v1228 = vpop.permute.xlu0 %1227
        %v1232 = vsel %vm588, %v1215, 0
        %v1235 = vsel %vm588, %v1216, 0
        %v1238 = vsel %vm588, %v1217, 0
        %v1241 = vsel %vm588, %v1218, 0
        %v1244 = vsel %vm588, %v1219, 0
        %v1247 = vsel %vm588, %v1220, 0
        %v1250 = vsel %vm588, %v1221, 0
        %v1253 = vsel %vm588, %v1222, 0
        %1255 = vmatprep.subr.bf16.mxu0 0
        %1256 = vmatpush1.bf16.msra.mxu0 %v1226
        %1257 = vmatprep.subr.bf16.mxu0 0
        %1258 = vmatpush1.bf16.msra.mxu0 %v1228
        %1259 = vmatprep.subr.bf16.mxu0 0
        %1260 = vmatpush1.bf16.msra.mxu0 0
        %1261 = vmatprep.subr.bf16.mxu0 0
        %1262 = vmatpush1.bf16.msra.mxu0 0
        %1263 = vmatprep.subr.bf16.mxu0 0
        %1264 = vmatpush1.bf16.msra.mxu0 0
        %1265 = vmatprep.subr.bf16.mxu0 0
        %1266 = vmatpush1.bf16.msra.mxu0 0
        %1267 = vmatprep.subr.bf16.mxu0 0
        %1268 = vmatpush1.bf16.msra.mxu0 0
        %1269 = vmatprep.subr.bf16.mxu0 0
        %1270 = vmatpush1.bf16.msra.mxu0 0
        %1271 = vmatprep.subr.bf16.mxu0 0
        %1272 = vmatpush1.bf16.msra.mxu0 0
        %1273 = vmatprep.subr.bf16.mxu0 0
        %1274 = vmatpush1.bf16.msra.mxu0 0
        %1275 = vmatprep.subr.bf16.mxu0 0
        %1276 = vmatpush1.bf16.msra.mxu0 0
        %1277 = vmatprep.subr.bf16.mxu0 0
        %1278 = vmatpush1.bf16.msra.mxu0 0
        %1279 = vmatprep.subr.bf16.mxu0 0
        %1280 = vmatpush1.bf16.msra.mxu0 0
        %1281 = vmatprep.subr.bf16.mxu0 0
        %1282 = vmatpush1.bf16.msra.mxu0 0
        %1283 = vmatprep.subr.bf16.mxu0 0
        %1284 = vmatpush1.bf16.msra.mxu0 0
        %1285 = vmatprep.subr.bf16.mxu0 0
        %1286 = vmatpush1.bf16.msra.mxu0 0
        %1287 = vmatprep.mubr.bf16.mxu0 0
        %1288 = vmatmul.mubr.bf16.gmra.mrb[0].mxu0 %v1232
        %v1289 = vpop.f32.mrb[0].mxu0
        %v1290 = vadd.f32 0.0, %v1289
        %v1291 = vpop.f32.mrb[0].mxu0
        %v1292 = vpop.f32.mrb[0].mxu0
        %v1293 = vadd.f32 0.0, %v1292
        %v1294 = vpop.f32.mrb[0].mxu0
        %1295 = vmatprep.mubr.bf16.mxu0 0
        %1296 = vmatmul.mubr.bf16.gmra.mrb[0].mxu0 %v1235
        %v1297 = vpop.f32.mrb[0].mxu0
        %v1298 = vadd.f32 0.0, %v1297
        %v1299 = vpop.f32.mrb[0].mxu0
        %v1300 = vpop.f32.mrb[0].mxu0
        %v1301 = vadd.f32 0.0, %v1300
        %v1302 = vpop.f32.mrb[0].mxu0
        %1303 = vmatprep.mubr.bf16.mxu0 0
        %1304 = vmatmul.mubr.bf16.gmra.mrb[0].mxu0 %v1238
        %v1305 = vpop.f32.mrb[0].mxu0
        %v1306 = vadd.f32 0.0, %v1305
        %v1307 = vpop.f32.mrb[0].mxu0
        %v1308 = vpop.f32.mrb[0].mxu0
        %v1309 = vadd.f32 0.0, %v1308
        %v1310 = vpop.f32.mrb[0].mxu0
        %1311 = vmatprep.mubr.bf16.mxu0 0
        %1312 = vmatmul.mubr.bf16.gmra.mrb[0].mxu0 %v1241
        %v1313 = vpop.f32.mrb[0].mxu0
        %v1314 = vadd.f32 0.0, %v1313
        %v1315 = vpop.f32.mrb[0].mxu0
        %v1316 = vpop.f32.mrb[0].mxu0
        %v1317 = vadd.f32 0.0, %v1316
        %v1318 = vpop.f32.mrb[0].mxu0
        %1319 = vmatprep.mubr.bf16.mxu0 0
        %1320 = vmatmul.mubr.bf16.gmra.mrb[0].mxu0 %v1244
        %v1321 = vpop.f32.mrb[0].mxu0
        %v1322 = vadd.f32 0.0, %v1321
        %v1323 = vpop.f32.mrb[0].mxu0
        %v1324 = vpop.f32.mrb[0].mxu0
        %v1325 = vadd.f32 0.0, %v1324
        %v1326 = vpop.f32.mrb[0].mxu0
        %1327 = vmatprep.mubr.bf16.mxu0 0
        %1328 = vmatmul.mubr.bf16.gmra.mrb[0].mxu0 %v1247
        %v1329 = vpop.f32.mrb[0].mxu0
        %v1330 = vadd.f32 0.0, %v1329
        %v1331 = vpop.f32.mrb[0].mxu0
        %v1332 = vpop.f32.mrb[0].mxu0
        %v1333 = vadd.f32 0.0, %v1332
        %v1334 = vpop.f32.mrb[0].mxu0
        %1335 = vmatprep.mubr.bf16.mxu0 0
        %1336 = vmatmul.mubr.bf16.gmra.mrb[0].mxu0 %v1250
        %v1337 = vpop.f32.mrb[0].mxu0
        %v1338 = vadd.f32 0.0, %v1337
        %v1339 = vpop.f32.mrb[0].mxu0
        %v1340 = vpop.f32.mrb[0].mxu0
        %v1341 = vadd.f32 0.0, %v1340
        %v1342 = vpop.f32.mrb[0].mxu0
        %1343 = vmatprep.mubr.bf16.mxu0 0
        %1344 = vmatmul.mubr.bf16.gmra.mrb[0].mxu0 %v1253
        %v1345 = vpop.f32.mrb[0].mxu0
        %v1346 = vadd.f32 0.0, %v1345
        %v1347 = vpop.f32.mrb[0].mxu0
        %v1348 = vpop.f32.mrb[0].mxu0
        %v1349 = vadd.f32 0.0, %v1348
        %v1350 = vpop.f32.mrb[0].mxu0
        %1351 = vdwg.mxu0
        %v1352 = vpack.c.bf16 %v1293, %v1290
        %v1353 = vpack.c.bf16 %v1301, %v1298
        %v1354 = vpack.c.bf16 %v1309, %v1306
        %v1355 = vpack.c.bf16 %v1317, %v1314
        %v1356 = vpack.c.bf16 %v1325, %v1322
        %v1357 = vpack.c.bf16 %v1333, %v1330
        %v1358 = vpack.c.bf16 %v1341, %v1338
        %v1359 = vpack.c.bf16 %v1349, %v1346
        %1361 = vrot.lane.b32.xlu0 %v721, 96
        %v1362 = vpop.permute.xlu0 %1361
        %1364 = vmatprep.subr.bf16.mxu0 0
        %1365 = vmatpush1.bf16.msra.mxu0 %v1352
        %1366 = vmatprep.subr.bf16.mxu0 0
        %1367 = vmatpush1.bf16.msra.mxu0 %v1353
        %1368 = vmatprep.subr.bf16.mxu0 0
        %1369 = vmatpush1.bf16.msra.mxu0 %v1354
        %1370 = vmatprep.subr.bf16.mxu0 0
        %1371 = vmatpush1.bf16.msra.mxu0 %v1355
        %1372 = vmatprep.subr.bf16.mxu0 0
        %1373 = vmatpush1.bf16.msra.mxu0 %v1356
        %1374 = vmatprep.subr.bf16.mxu0 0
        %1375 = vmatpush1.bf16.msra.mxu0 %v1357
        %1376 = vmatprep.subr.bf16.mxu0 0
        %1377 = vmatpush1.bf16.msra.mxu0 %v1358
        %1378 = vmatprep.subr.bf16.mxu0 0
        %1379 = vmatpush1.bf16.msra.mxu0 %v1359
        %1380 = vmatprep.subr.bf16.mxu0 0
        %1381 = vmatpush1.bf16.msra.mxu0 0
        %1382 = vmatprep.subr.bf16.mxu0 0
        %1383 = vmatpush1.bf16.msra.mxu0 0
        %1384 = vmatprep.subr.bf16.mxu0 0
        %1385 = vmatpush1.bf16.msra.mxu0 0
        %1386 = vmatprep.subr.bf16.mxu0 0
        %1387 = vmatpush1.bf16.msra.mxu0 0
        %1388 = vmatprep.subr.bf16.mxu0 0
        %1389 = vmatpush1.bf16.msra.mxu0 0
        %1390 = vmatprep.subr.bf16.mxu0 0
        %1391 = vmatpush1.bf16.msra.mxu0 0
        %1392 = vmatprep.subr.bf16.mxu0 0
        %1393 = vmatpush1.bf16.msra.mxu0 0
        %1394 = vmatprep.subr.bf16.mxu0 0
        %1395 = vmatpush1.bf16.msra.mxu0 0
        %1396 = vmatprep.mubr.bf16.mxu0 0
        %1397 = vmatmul.mubr.bf16.gmra.mrb[0].mxu0 %v754
        %v1398 = vpop.f32.mrb[0].mxu0
        %v1399 = vadd.f32 %v1362, %v1398
        %v1400 = vpop.f32.mrb[0].mxu0
        %v1401 = vpop.f32.mrb[0].mxu0
        %v1402 = vadd.f32 %v1362, %v1401
        %v1403 = vpop.f32.mrb[0].mxu0
        %1404 = vmatprep.mubr.bf16.mxu0 0
        %1405 = vmatmul.mubr.bf16.gmra.mrb[0].mxu0 %v755
        %v1406 = vpop.f32.mrb[0].mxu0
        %v1407 = vadd.f32 %v1362, %v1406
        %v1408 = vpop.f32.mrb[0].mxu0
        %v1409 = vpop.f32.mrb[0].mxu0
        %v1410 = vadd.f32 %v1362, %v1409
        %v1411 = vpop.f32.mrb[0].mxu0
        %1412 = vmatprep.mubr.bf16.mxu0 0
        %1413 = vmatmul.mubr.bf16.gmra.mrb[0].mxu0 %v756
        %v1414 = vpop.f32.mrb[0].mxu0
        %v1415 = vadd.f32 %v1362, %v1414
        %v1416 = vpop.f32.mrb[0].mxu0
        %v1417 = vpop.f32.mrb[0].mxu0
        %v1418 = vadd.f32 %v1362, %v1417
        %v1419 = vpop.f32.mrb[0].mxu0
        %1420 = vmatprep.mubr.bf16.mxu0 0
        %1421 = vmatmul.mubr.bf16.gmra.mrb[0].mxu0 %v757
        %v1422 = vpop.f32.mrb[0].mxu0
        %v1423 = vadd.f32 %v1362, %v1422
        %v1424 = vpop.f32.mrb[0].mxu0
        %v1425 = vpop.f32.mrb[0].mxu0
        %v1426 = vadd.f32 %v1362, %v1425
        %v1427 = vpop.f32.mrb[0].mxu0
        %1428 = vmatprep.mubr.bf16.mxu0 0
        %1429 = vmatmul.mubr.bf16.gmra.mrb[0].mxu0 %v758
        %v1430 = vpop.f32.mrb[0].mxu0
        %v1431 = vadd.f32 %v1362, %v1430
        %v1432 = vpop.f32.mrb[0].mxu0
        %v1433 = vpop.f32.mrb[0].mxu0
        %v1434 = vadd.f32 %v1362, %v1433
        %v1435 = vpop.f32.mrb[0].mxu0
        %1436 = vmatprep.mubr.bf16.mxu0 0
        %1437 = vmatmul.mubr.bf16.gmra.mrb[0].mxu0 %v759
        %v1438 = vpop.f32.mrb[0].mxu0
        %v1439 = vadd.f32 %v1362, %v1438
        %v1440 = vpop.f32.mrb[0].mxu0
        %v1441 = vpop.f32.mrb[0].mxu0
        %v1442 = vadd.f32 %v1362, %v1441
        %v1443 = vpop.f32.mrb[0].mxu0
        %1444 = vmatprep.mubr.bf16.mxu0 0
        %1445 = vmatmul.mubr.bf16.gmra.mrb[0].mxu0 %v760
        %v1446 = vpop.f32.mrb[0].mxu0
        %v1447 = vadd.f32 %v1362, %v1446
        %v1448 = vpop.f32.mrb[0].mxu0
        %v1449 = vpop.f32.mrb[0].mxu0
        %v1450 = vadd.f32 %v1362, %v1449
        %v1451 = vpop.f32.mrb[0].mxu0
        %1452 = vmatprep.mubr.bf16.mxu0 0
        %1453 = vmatmul.mubr.bf16.gmra.mrb[0].mxu0 %v761
        %v1454 = vpop.f32.mrb[0].mxu0
        %v1455 = vadd.f32 %v1362, %v1454
        %v1456 = vpop.f32.mrb[0].mxu0
        %v1457 = vpop.f32.mrb[0].mxu0
        %v1458 = vadd.f32 %v1362, %v1457
        %v1459 = vpop.f32.mrb[0].mxu0
        %1460 = vdwg.mxu0
        %v1461 = vmax.f32 %v1399, 0.0
        %v1462 = vmax.f32 %v1402, 0.0
        %v1463 = vmax.f32 %v1407, 0.0
        %v1464 = vmax.f32 %v1410, 0.0
        %v1465 = vmax.f32 %v1415, 0.0
        %v1466 = vmax.f32 %v1418, 0.0
        %v1467 = vmax.f32 %v1423, 0.0
        %v1468 = vmax.f32 %v1426, 0.0
        %v1469 = vmax.f32 %v1431, 0.0
        %v1470 = vmax.f32 %v1434, 0.0
        %v1471 = vmax.f32 %v1439, 0.0
        %v1472 = vmax.f32 %v1442, 0.0
        %v1473 = vmax.f32 %v1447, 0.0
        %v1474 = vmax.f32 %v1450, 0.0
        %v1475 = vmax.f32 %v1455, 0.0
        %v1476 = vmax.f32 %v1458, 0.0
        %v1477 = vsel %vm588, %v1461, 0.0
        %v1478 = vsel %vm588, %v1462, 0.0
        %v1479 = vadd.f32 %v1477, %v1478
        %v1480 = vrot.slane %v1479, 4
        %v1481 = vadd.f32 %v1479, %v1480
        %v1482 = vrot.slane %v1481, 2
        %v1483 = vadd.f32 %v1481, %v1482
        %v1484 = vrot.slane %v1483, 1
        %v1485 = vadd.f32 %v1483, %v1484
        %v1486 = vsel %vm588, %v1463, 0.0
        %v1487 = vsel %vm588, %v1464, 0.0
        %v1488 = vadd.f32 %v1486, %v1487
        %v1489 = vrot.slane %v1488, 4
        %v1490 = vadd.f32 %v1488, %v1489
        %v1491 = vrot.slane %v1490, 2
        %v1492 = vadd.f32 %v1490, %v1491
        %v1493 = vrot.slane %v1492, 1
        %v1494 = vadd.f32 %v1492, %v1493
        %v1495 = vsel %vm588, %v1465, 0.0
        %v1496 = vsel %vm588, %v1466, 0.0
        %v1497 = vadd.f32 %v1495, %v1496
        %v1498 = vrot.slane %v1497, 4
        %v1499 = vadd.f32 %v1497, %v1498
        %v1500 = vrot.slane %v1499, 2
        %v1501 = vadd.f32 %v1499, %v1500
        %v1502 = vrot.slane %v1501, 1
        %v1503 = vadd.f32 %v1501, %v1502
        %v1504 = vsel %vm588, %v1467, 0.0
        %v1505 = vsel %vm588, %v1468, 0.0
        %v1506 = vadd.f32 %v1504, %v1505
        %v1507 = vrot.slane %v1506, 4
        %v1508 = vadd.f32 %v1506, %v1507
        %v1509 = vrot.slane %v1508, 2
        %v1510 = vadd.f32 %v1508, %v1509
        %v1511 = vrot.slane %v1510, 1
        %v1512 = vadd.f32 %v1510, %v1511
        %v1513 = vsel %vm588, %v1469, 0.0
        %v1514 = vsel %vm588, %v1470, 0.0
        %v1515 = vadd.f32 %v1513, %v1514
        %v1516 = vrot.slane %v1515, 4
        %v1517 = vadd.f32 %v1515, %v1516
        %v1518 = vrot.slane %v1517, 2
        %v1519 = vadd.f32 %v1517, %v1518
        %v1520 = vrot.slane %v1519, 1
        %v1521 = vadd.f32 %v1519, %v1520
        %v1522 = vsel %vm588, %v1471, 0.0
        %v1523 = vsel %vm588, %v1472, 0.0
        %v1524 = vadd.f32 %v1522, %v1523
        %v1525 = vrot.slane %v1524, 4
        %v1526 = vadd.f32 %v1524, %v1525
        %v1527 = vrot.slane %v1526, 2
        %v1528 = vadd.f32 %v1526, %v1527
        %v1529 = vrot.slane %v1528, 1
        %v1530 = vadd.f32 %v1528, %v1529
        %v1531 = vsel %vm588, %v1473, 0.0
        %v1532 = vsel %vm588, %v1474, 0.0
        %v1533 = vadd.f32 %v1531, %v1532
        %v1534 = vrot.slane %v1533, 4
        %v1535 = vadd.f32 %v1533, %v1534
        %v1536 = vrot.slane %v1535, 2
        %v1537 = vadd.f32 %v1535, %v1536
        %v1538 = vrot.slane %v1537, 1
        %v1539 = vadd.f32 %v1537, %v1538
        %v1540 = vsel %vm588, %v1475, 0.0
        %v1541 = vsel %vm588, %v1476, 0.0
        %v1542 = vadd.f32 %v1540, %v1541
        %v1543 = vrot.slane %v1542, 4
        %v1544 = vadd.f32 %v1542, %v1543
        %v1545 = vrot.slane %v1544, 2
        %v1546 = vadd.f32 %v1544, %v1545
        %v1547 = vrot.slane %v1546, 1
        %v1548 = vadd.f32 %v1546, %v1547
        %v1549 = vmul.f32 %v1485, %v955
        %v1550 = vmul.f32 %v1494, %v955
        %v1551 = vmul.f32 %v1503, %v955
        %v1552 = vmul.f32 %v1512, %v955
        %v1553 = vmul.f32 %v1521, %v955
        %v1554 = vmul.f32 %v1530, %v955
        %v1555 = vmul.f32 %v1539, %v955
        %v1556 = vmul.f32 %v1548, %v955
        %v1557 = vsub.f32 %v1461, %v1549
        %v1558 = vsub.f32 %v1462, %v1549
        %v1559 = vsub.f32 %v1463, %v1550
        %v1560 = vsub.f32 %v1464, %v1550
        %v1561 = vsub.f32 %v1465, %v1551
        %v1562 = vsub.f32 %v1466, %v1551
        %v1563 = vsub.f32 %v1467, %v1552
        %v1564 = vsub.f32 %v1468, %v1552
        %v1565 = vsub.f32 %v1469, %v1553
        %v1566 = vsub.f32 %v1470, %v1553
        %v1567 = vsub.f32 %v1471, %v1554
        %v1568 = vsub.f32 %v1472, %v1554
        %v1569 = vsub.f32 %v1473, %v1555
        %v1570 = vsub.f32 %v1474, %v1555
        %v1571 = vsub.f32 %v1475, %v1556
        %v1572 = vsub.f32 %v1476, %v1556
        %v1573 = vmul.f32 %v1557, %v1557
        %v1574 = vmul.f32 %v1558, %v1558
        %v1575 = vmul.f32 %v1559, %v1559
        %v1576 = vmul.f32 %v1560, %v1560
        %v1577 = vmul.f32 %v1561, %v1561
        %v1578 = vmul.f32 %v1562, %v1562
        %v1579 = vmul.f32 %v1563, %v1563
        %v1580 = vmul.f32 %v1564, %v1564
        %v1581 = vmul.f32 %v1565, %v1565
        %v1582 = vmul.f32 %v1566, %v1566
        %v1583 = vmul.f32 %v1567, %v1567
        %v1584 = vmul.f32 %v1568, %v1568
        %v1585 = vmul.f32 %v1569, %v1569
        %v1586 = vmul.f32 %v1570, %v1570
        %v1587 = vmul.f32 %v1571, %v1571
        %v1588 = vmul.f32 %v1572, %v1572
        %v1589 = vsel %vm588, %v1573, 0.0
        %1590 = vadd.xlane.f32.xlu0 %v1589
        %v1591 = vpop.xlane.xlu0 %1590
        %v1592 = vsel %vm588, %v1574, 0.0
        %1593 = vadd.xlane.f32.xlu0 %v1592
        %v1594 = vpop.xlane.xlu0 %1593
        %v1595 = vsel %vm588, %v1575, 0.0
        %1596 = vadd.xlane.f32.xlu0 %v1595
        %v1597 = vpop.xlane.xlu0 %1596
        %v1598 = vsel %vm588, %v1576, 0.0
        %1599 = vadd.xlane.f32.xlu0 %v1598
        %v1600 = vpop.xlane.xlu0 %1599
        %v1601 = vsel %vm588, %v1577, 0.0
        %1602 = vadd.xlane.f32.xlu0 %v1601
        %v1603 = vpop.xlane.xlu0 %1602
        %v1604 = vsel %vm588, %v1578, 0.0
        %1605 = vadd.xlane.f32.xlu0 %v1604
        %v1606 = vpop.xlane.xlu0 %1605
        %v1607 = vsel %vm588, %v1579, 0.0
        %1608 = vadd.xlane.f32.xlu0 %v1607
        %v1609 = vpop.xlane.xlu0 %1608
        %v1610 = vsel %vm588, %v1580, 0.0
        %1611 = vadd.xlane.f32.xlu0 %v1610
        %v1612 = vpop.xlane.xlu0 %1611
        %v1613 = vsel %vm588, %v1581, 0.0
        %1614 = vadd.xlane.f32.xlu0 %v1613
        %v1615 = vpop.xlane.xlu0 %1614
        %v1616 = vsel %vm588, %v1582, 0.0
        %1617 = vadd.xlane.f32.xlu0 %v1616
        %v1618 = vpop.xlane.xlu0 %1617
        %v1619 = vsel %vm588, %v1583, 0.0
        %1620 = vadd.xlane.f32.xlu0 %v1619
        %v1621 = vpop.xlane.xlu0 %1620
        %v1622 = vsel %vm588, %v1584, 0.0
        %1623 = vadd.xlane.f32.xlu0 %v1622
        %v1624 = vpop.xlane.xlu0 %1623
        %v1625 = vsel %vm588, %v1585, 0.0
        %1626 = vadd.xlane.f32.xlu0 %v1625
        %v1627 = vpop.xlane.xlu0 %1626
        %v1628 = vsel %vm588, %v1586, 0.0
        %1629 = vadd.xlane.f32.xlu0 %v1628
        %v1630 = vpop.xlane.xlu0 %1629
        %v1631 = vsel %vm588, %v1587, 0.0
        %1632 = vadd.xlane.f32.xlu0 %v1631
        %v1633 = vpop.xlane.xlu0 %1632
        %v1634 = vsel %vm588, %v1588, 0.0
        %1635 = vadd.xlane.f32.xlu0 %v1634
        %v1636 = vpop.xlane.xlu0 %1635
        %v1653 = vlaneseq
        %v1654 = vshrl.u32 %v1653, 7
        %v1655 = vsub.s32 %v1061, %v1654
        %v1656 = vrot.slane %v1591, %v1655
        %v1657 = vlaneseq
        %v1658 = vshrl.u32 %v1657, 7
        %v1659 = vsub.s32 %v1066, %v1658
        %v1660 = vrot.slane %v1594, %v1659
        %v1661 = vsel %vm1071, %v1660, %v1656
        %v1662 = vlaneseq
        %v1663 = vshrl.u32 %v1662, 7
        %v1664 = vsub.s32 %v1061, %v1663
        %v1665 = vrot.slane %v1597, %v1664
        %v1666 = vlaneseq
        %v1667 = vshrl.u32 %v1666, 7
        %v1668 = vsub.s32 %v1066, %v1667
        %v1669 = vrot.slane %v1600, %v1668
        %v1670 = vsel %vm1071, %v1669, %v1665
        %v1671 = vlaneseq
        %v1672 = vshrl.u32 %v1671, 7
        %v1673 = vsub.s32 %v1061, %v1672
        %v1674 = vrot.slane %v1603, %v1673
        %v1675 = vlaneseq
        %v1676 = vshrl.u32 %v1675, 7
        %v1677 = vsub.s32 %v1066, %v1676
        %v1678 = vrot.slane %v1606, %v1677
        %v1679 = vsel %vm1071, %v1678, %v1674
        %v1680 = vlaneseq
        %v1681 = vshrl.u32 %v1680, 7
        %v1682 = vsub.s32 %v1061, %v1681
        %v1683 = vrot.slane %v1609, %v1682
        %v1684 = vlaneseq
        %v1685 = vshrl.u32 %v1684, 7
        %v1686 = vsub.s32 %v1066, %v1685
        %v1687 = vrot.slane %v1612, %v1686
        %v1688 = vsel %vm1071, %v1687, %v1683
        %v1689 = vlaneseq
        %v1690 = vshrl.u32 %v1689, 7
        %v1691 = vsub.s32 %v1061, %v1690
        %v1692 = vrot.slane %v1615, %v1691
        %v1693 = vlaneseq
        %v1694 = vshrl.u32 %v1693, 7
        %v1695 = vsub.s32 %v1066, %v1694
        %v1696 = vrot.slane %v1618, %v1695
        %v1697 = vsel %vm1071, %v1696, %v1692
        %v1698 = vlaneseq
        %v1699 = vshrl.u32 %v1698, 7
        %v1700 = vsub.s32 %v1061, %v1699
        %v1701 = vrot.slane %v1621, %v1700
        %v1702 = vlaneseq
        %v1703 = vshrl.u32 %v1702, 7
        %v1704 = vsub.s32 %v1066, %v1703
        %v1705 = vrot.slane %v1624, %v1704
        %v1706 = vsel %vm1071, %v1705, %v1701
        %v1707 = vlaneseq
        %v1708 = vshrl.u32 %v1707, 7
        %v1709 = vsub.s32 %v1061, %v1708
        %v1710 = vrot.slane %v1627, %v1709
        %v1711 = vlaneseq
        %v1712 = vshrl.u32 %v1711, 7
        %v1713 = vsub.s32 %v1066, %v1712
        %v1714 = vrot.slane %v1630, %v1713
        %v1715 = vsel %vm1071, %v1714, %v1710
        %v1716 = vlaneseq
        %v1717 = vshrl.u32 %v1716, 7
        %v1718 = vsub.s32 %v1061, %v1717
        %v1719 = vrot.slane %v1633, %v1718
        %v1720 = vlaneseq
        %v1721 = vshrl.u32 %v1720, 7
        %v1722 = vsub.s32 %v1066, %v1721
        %v1723 = vrot.slane %v1636, %v1722
        %v1724 = vsel %vm1071, %v1723, %v1719
        %v1725 = vsel %vm1136, %v1670, %v1661
        %v1726 = vsel %vm1138, %v1679, %v1725
        %v1727 = vsel %vm1140, %v1688, %v1726
        %v1728 = vsel %vm1142, %v1697, %v1727
        %v1729 = vsel %vm1144, %v1706, %v1728
        %v1730 = vsel %vm1146, %v1715, %v1729
        %v1731 = vsel %vm1148, %v1724, %v1730
        %v1733 = vsel %vm1151, %v1731, 0.0
        %1734 = vadd.xlane.f32.xlu0 %v1733
        %v1735 = vpop.xlane.xlu0 %1734
        %v1736 = vmul.f32 %v1735, %v955
        %v1737 = vadd.f32 %v1736, 1e-05
        %v1738 = vrsqrt.pop %v1737
        %v1740 = vlaneseq
        %v1741 = vshrl.u32 %v1740, 7
        %v1742 = vsub.s32 0, %v1741
        %v1743 = vrot.slane %v1738, %v1742
        %v1744 = vlaneseq
        %v1745 = vshrl.u32 %v1744, 7
        %v1746 = vsub.s32 1, %v1745
        %v1747 = vrot.slane %v1738, %v1746
        %v1748 = vlaneseq
        %v1749 = vshrl.u32 %v1748, 7
        %v1750 = vsub.s32 2, %v1749
        %v1751 = vrot.slane %v1738, %v1750
        %v1752 = vlaneseq
        %v1753 = vshrl.u32 %v1752, 7
        %v1754 = vsub.s32 3, %v1753
        %v1755 = vrot.slane %v1738, %v1754
        %v1756 = vlaneseq
        %v1757 = vshrl.u32 %v1756, 7
        %v1758 = vsub.s32 4, %v1757
        %v1759 = vrot.slane %v1738, %v1758
        %v1760 = vlaneseq
        %v1761 = vshrl.u32 %v1760, 7
        %v1762 = vsub.s32 5, %v1761
        %v1763 = vrot.slane %v1738, %v1762
        %v1764 = vlaneseq
        %v1765 = vshrl.u32 %v1764, 7
        %v1766 = vsub.s32 6, %v1765
        %v1767 = vrot.slane %v1738, %v1766
        %v1768 = vlaneseq
        %v1769 = vshrl.u32 %v1768, 7
        %v1770 = vsub.s32 7, %v1769
        %v1771 = vrot.slane %v1738, %v1770
        %v1780 = vmul.f32 %v1743, %v1557
        %v1781 = vmul.f32 %v1743, %v1558
        %v1782 = vmul.f32 %v1747, %v1559
        %v1783 = vmul.f32 %v1747, %v1560
        %v1784 = vmul.f32 %v1751, %v1561
        %v1785 = vmul.f32 %v1751, %v1562
        %v1786 = vmul.f32 %v1755, %v1563
        %v1787 = vmul.f32 %v1755, %v1564
        %v1788 = vmul.f32 %v1759, %v1565
        %v1789 = vmul.f32 %v1759, %v1566
        %v1790 = vmul.f32 %v1763, %v1567
        %v1791 = vmul.f32 %v1763, %v1568
        %v1792 = vmul.f32 %v1767, %v1569
        %v1793 = vmul.f32 %v1767, %v1570
        %v1794 = vmul.f32 %v1771, %v1571
        %v1795 = vmul.f32 %v1771, %v1572
        %v1796 = vpack.c.bf16 %v1781, %v1780
        %v1797 = vpack.c.bf16 %v1783, %v1782
        %v1798 = vpack.c.bf16 %v1785, %v1784
        %v1799 = vpack.c.bf16 %v1787, %v1786
        %v1800 = vpack.c.bf16 %v1789, %v1788
        %v1801 = vpack.c.bf16 %v1791, %v1790
        %v1802 = vpack.c.bf16 %v1793, %v1792
        %v1803 = vpack.c.bf16 %v1795, %v1794
        %1804 = vrot.lane.b32.xlu0 %v577, 64
        %v1805 = vpop.permute.xlu0 %1804
        %1806 = vrot.lane.b32.xlu0 %v578, 64
        %v1807 = vpop.permute.xlu0 %1806
        %v1811 = vsel %vm588, %v1796, 0
        %v1814 = vsel %vm588, %v1797, 0
        %v1817 = vsel %vm588, %v1798, 0
        %v1820 = vsel %vm588, %v1799, 0
        %v1823 = vsel %vm588, %v1800, 0
        %v1826 = vsel %vm588, %v1801, 0
        %v1829 = vsel %vm588, %v1802, 0
        %v1832 = vsel %vm588, %v1803, 0
        %1834 = vmatprep.subr.bf16.mxu0 0
        %1835 = vmatpush1.bf16.msra.mxu0 %v1805
        %1836 = vmatprep.subr.bf16.mxu0 0
        %1837 = vmatpush1.bf16.msra.mxu0 %v1807
        %1838 = vmatprep.subr.bf16.mxu0 0
        %1839 = vmatpush1.bf16.msra.mxu0 0
        %1840 = vmatprep.subr.bf16.mxu0 0
        %1841 = vmatpush1.bf16.msra.mxu0 0
        %1842 = vmatprep.subr.bf16.mxu0 0
        %1843 = vmatpush1.bf16.msra.mxu0 0
        %1844 = vmatprep.subr.bf16.mxu0 0
        %1845 = vmatpush1.bf16.msra.mxu0 0
        %1846 = vmatprep.subr.bf16.mxu0 0
        %1847 = vmatpush1.bf16.msra.mxu0 0
        %1848 = vmatprep.subr.bf16.mxu0 0
        %1849 = vmatpush1.bf16.msra.mxu0 0
        %1850 = vmatprep.subr.bf16.mxu0 0
        %1851 = vmatpush1.bf16.msra.mxu0 0
        %1852 = vmatprep.subr.bf16.mxu0 0
        %1853 = vmatpush1.bf16.msra.mxu0 0
        %1854 = vmatprep.subr.bf16.mxu0 0
        %1855 = vmatpush1.bf16.msra.mxu0 0
        %1856 = vmatprep.subr.bf16.mxu0 0
        %1857 = vmatpush1.bf16.msra.mxu0 0
        %1858 = vmatprep.subr.bf16.mxu0 0
        %1859 = vmatpush1.bf16.msra.mxu0 0
        %1860 = vmatprep.subr.bf16.mxu0 0
        %1861 = vmatpush1.bf16.msra.mxu0 0
        %1862 = vmatprep.subr.bf16.mxu0 0
        %1863 = vmatpush1.bf16.msra.mxu0 0
        %1864 = vmatprep.subr.bf16.mxu0 0
        %1865 = vmatpush1.bf16.msra.mxu0 0
        %1866 = vmatprep.mubr.bf16.mxu0 0
        %1867 = vmatmul.mubr.bf16.gmra.mrb[0].mxu0 %v1811
        %v1868 = vpop.f32.mrb[0].mxu0
        %v1869 = vadd.f32 0.0, %v1868
        %v1870 = vpop.f32.mrb[0].mxu0
        %v1871 = vpop.f32.mrb[0].mxu0
        %v1872 = vadd.f32 0.0, %v1871
        %v1873 = vpop.f32.mrb[0].mxu0
        %1874 = vmatprep.mubr.bf16.mxu0 0
        %1875 = vmatmul.mubr.bf16.gmra.mrb[0].mxu0 %v1814
        %v1876 = vpop.f32.mrb[0].mxu0
        %v1877 = vadd.f32 0.0, %v1876
        %v1878 = vpop.f32.mrb[0].mxu0
        %v1879 = vpop.f32.mrb[0].mxu0
        %v1880 = vadd.f32 0.0, %v1879
        %v1881 = vpop.f32.mrb[0].mxu0
        %1882 = vmatprep.mubr.bf16.mxu0 0
        %1883 = vmatmul.mubr.bf16.gmra.mrb[0].mxu0 %v1817
        %v1884 = vpop.f32.mrb[0].mxu0
        %v1885 = vadd.f32 0.0, %v1884
        %v1886 = vpop.f32.mrb[0].mxu0
        %v1887 = vpop.f32.mrb[0].mxu0
        %v1888 = vadd.f32 0.0, %v1887
        %v1889 = vpop.f32.mrb[0].mxu0
        %1890 = vmatprep.mubr.bf16.mxu0 0
        %1891 = vmatmul.mubr.bf16.gmra.mrb[0].mxu0 %v1820
        %v1892 = vpop.f32.mrb[0].mxu0
        %v1893 = vadd.f32 0.0, %v1892
        %v1894 = vpop.f32.mrb[0].mxu0
        %v1895 = vpop.f32.mrb[0].mxu0
        %v1896 = vadd.f32 0.0, %v1895
        %v1897 = vpop.f32.mrb[0].mxu0
        %1898 = vmatprep.mubr.bf16.mxu0 0
        %1899 = vmatmul.mubr.bf16.gmra.mrb[0].mxu0 %v1823
        %v1900 = vpop.f32.mrb[0].mxu0
        %v1901 = vadd.f32 0.0, %v1900
        %v1902 = vpop.f32.mrb[0].mxu0
        %v1903 = vpop.f32.mrb[0].mxu0
        %v1904 = vadd.f32 0.0, %v1903
        %v1905 = vpop.f32.mrb[0].mxu0
        %1906 = vmatprep.mubr.bf16.mxu0 0
        %1907 = vmatmul.mubr.bf16.gmra.mrb[0].mxu0 %v1826
        %v1908 = vpop.f32.mrb[0].mxu0
        %v1909 = vadd.f32 0.0, %v1908
        %v1910 = vpop.f32.mrb[0].mxu0
        %v1911 = vpop.f32.mrb[0].mxu0
        %v1912 = vadd.f32 0.0, %v1911
        %v1913 = vpop.f32.mrb[0].mxu0
        %1914 = vmatprep.mubr.bf16.mxu0 0
        %1915 = vmatmul.mubr.bf16.gmra.mrb[0].mxu0 %v1829
        %v1916 = vpop.f32.mrb[0].mxu0
        %v1917 = vadd.f32 0.0, %v1916
        %v1918 = vpop.f32.mrb[0].mxu0
        %v1919 = vpop.f32.mrb[0].mxu0
        %v1920 = vadd.f32 0.0, %v1919
        %v1921 = vpop.f32.mrb[0].mxu0
        %1922 = vmatprep.mubr.bf16.mxu0 0
        %1923 = vmatmul.mubr.bf16.gmra.mrb[0].mxu0 %v1832
        %v1924 = vpop.f32.mrb[0].mxu0
        %v1925 = vadd.f32 0.0, %v1924
        %v1926 = vpop.f32.mrb[0].mxu0
        %v1927 = vpop.f32.mrb[0].mxu0
        %v1928 = vadd.f32 0.0, %v1927
        %v1929 = vpop.f32.mrb[0].mxu0
        %1930 = vdwg.mxu0
        %v1931 = vpack.c.bf16 %v1872, %v1869
        %v1932 = vpack.c.bf16 %v1880, %v1877
        %v1933 = vpack.c.bf16 %v1888, %v1885
        %v1934 = vpack.c.bf16 %v1896, %v1893
        %v1935 = vpack.c.bf16 %v1904, %v1901
        %v1936 = vpack.c.bf16 %v1912, %v1909
        %v1937 = vpack.c.bf16 %v1920, %v1917
        %v1938 = vpack.c.bf16 %v1928, %v1925
        %1939 = vrot.lane.b32.xlu0 %v721, 64
        %v1940 = vpop.permute.xlu0 %1939
        %1942 = vmatprep.subr.bf16.mxu0 0
        %1943 = vmatpush1.bf16.msra.mxu0 %v1931
        %1944 = vmatprep.subr.bf16.mxu0 0
        %1945 = vmatpush1.bf16.msra.mxu0 %v1932
        %1946 = vmatprep.subr.bf16.mxu0 0
        %1947 = vmatpush1.bf16.msra.mxu0 %v1933
        %1948 = vmatprep.subr.bf16.mxu0 0
        %1949 = vmatpush1.bf16.msra.mxu0 %v1934
        %1950 = vmatprep.subr.bf16.mxu0 0
        %1951 = vmatpush1.bf16.msra.mxu0 %v1935
        %1952 = vmatprep.subr.bf16.mxu0 0
        %1953 = vmatpush1.bf16.msra.mxu0 %v1936
        %1954 = vmatprep.subr.bf16.mxu0 0
        %1955 = vmatpush1.bf16.msra.mxu0 %v1937
        %1956 = vmatprep.subr.bf16.mxu0 0
        %1957 = vmatpush1.bf16.msra.mxu0 %v1938
        %1958 = vmatprep.subr.bf16.mxu0 0
        %1959 = vmatpush1.bf16.msra.mxu0 0
        %1960 = vmatprep.subr.bf16.mxu0 0
        %1961 = vmatpush1.bf16.msra.mxu0 0
        %1962 = vmatprep.subr.bf16.mxu0 0
        %1963 = vmatpush1.bf16.msra.mxu0 0
        %1964 = vmatprep.subr.bf16.mxu0 0
        %1965 = vmatpush1.bf16.msra.mxu0 0
        %1966 = vmatprep.subr.bf16.mxu0 0
        %1967 = vmatpush1.bf16.msra.mxu0 0
        %1968 = vmatprep.subr.bf16.mxu0 0
        %1969 = vmatpush1.bf16.msra.mxu0 0
        %1970 = vmatprep.subr.bf16.mxu0 0
        %1971 = vmatpush1.bf16.msra.mxu0 0
        %1972 = vmatprep.subr.bf16.mxu0 0
        %1973 = vmatpush1.bf16.msra.mxu0 0
        %1974 = vmatprep.mubr.bf16.mxu0 0
        %1975 = vmatmul.mubr.bf16.gmra.mrb[0].mxu0 %v754
        %v1976 = vpop.f32.mrb[0].mxu0
        %v1977 = vadd.f32 %v1940, %v1976
        %v1978 = vpop.f32.mrb[0].mxu0
        %v1979 = vpop.f32.mrb[0].mxu0
        %v1980 = vadd.f32 %v1940, %v1979
        %v1981 = vpop.f32.mrb[0].mxu0
        %1982 = vmatprep.mubr.bf16.mxu0 0
        %1983 = vmatmul.mubr.bf16.gmra.mrb[0].mxu0 %v755
        %v1984 = vpop.f32.mrb[0].mxu0
        %v1985 = vadd.f32 %v1940, %v1984
        %v1986 = vpop.f32.mrb[0].mxu0
        %v1987 = vpop.f32.mrb[0].mxu0
        %v1988 = vadd.f32 %v1940, %v1987
        %v1989 = vpop.f32.mrb[0].mxu0
        %1990 = vmatprep.mubr.bf16.mxu0 0
        %1991 = vmatmul.mubr.bf16.gmra.mrb[0].mxu0 %v756
        %v1992 = vpop.f32.mrb[0].mxu0
        %v1993 = vadd.f32 %v1940, %v1992
        %v1994 = vpop.f32.mrb[0].mxu0
        %v1995 = vpop.f32.mrb[0].mxu0
        %v1996 = vadd.f32 %v1940, %v1995
        %v1997 = vpop.f32.mrb[0].mxu0
        %1998 = vmatprep.mubr.bf16.mxu0 0
        %1999 = vmatmul.mubr.bf16.gmra.mrb[0].mxu0 %v757
        %v2000 = vpop.f32.mrb[0].mxu0
        %v2001 = vadd.f32 %v1940, %v2000
        %v2002 = vpop.f32.mrb[0].mxu0
        %v2003 = vpop.f32.mrb[0].mxu0
        %v2004 = vadd.f32 %v1940, %v2003
        %v2005 = vpop.f32.mrb[0].mxu0
        %2006 = vmatprep.mubr.bf16.mxu0 0
        %2007 = vmatmul.mubr.bf16.gmra.mrb[0].mxu0 %v758
        %v2008 = vpop.f32.mrb[0].mxu0
        %v2009 = vadd.f32 %v1940, %v2008
        %v2010 = vpop.f32.mrb[0].mxu0
        %v2011 = vpop.f32.mrb[0].mxu0
        %v2012 = vadd.f32 %v1940, %v2011
        %v2013 = vpop.f32.mrb[0].mxu0
        %2014 = vmatprep.mubr.bf16.mxu0 0
        %2015 = vmatmul.mubr.bf16.gmra.mrb[0].mxu0 %v759
        %v2016 = vpop.f32.mrb[0].mxu0
        %v2017 = vadd.f32 %v1940, %v2016
        %v2018 = vpop.f32.mrb[0].mxu0
        %v2019 = vpop.f32.mrb[0].mxu0
        %v2020 = vadd.f32 %v1940, %v2019
        %v2021 = vpop.f32.mrb[0].mxu0
        %2022 = vmatprep.mubr.bf16.mxu0 0
        %2023 = vmatmul.mubr.bf16.gmra.mrb[0].mxu0 %v760
        %v2024 = vpop.f32.mrb[0].mxu0
        %v2025 = vadd.f32 %v1940, %v2024
        %v2026 = vpop.f32.mrb[0].mxu0
        %v2027 = vpop.f32.mrb[0].mxu0
        %v2028 = vadd.f32 %v1940, %v2027
        %v2029 = vpop.f32.mrb[0].mxu0
        %2030 = vmatprep.mubr.bf16.mxu0 0
        %2031 = vmatmul.mubr.bf16.gmra.mrb[0].mxu0 %v761
        %v2032 = vpop.f32.mrb[0].mxu0
        %v2033 = vadd.f32 %v1940, %v2032
        %v2034 = vpop.f32.mrb[0].mxu0
        %v2035 = vpop.f32.mrb[0].mxu0
        %v2036 = vadd.f32 %v1940, %v2035
        %v2037 = vpop.f32.mrb[0].mxu0
        %2038 = vdwg.mxu0
        %v2039 = vmax.f32 %v1977, 0.0
        %v2040 = vmax.f32 %v1980, 0.0
        %v2041 = vmax.f32 %v1985, 0.0
        %v2042 = vmax.f32 %v1988, 0.0
        %v2043 = vmax.f32 %v1993, 0.0
        %v2044 = vmax.f32 %v1996, 0.0
        %v2045 = vmax.f32 %v2001, 0.0
        %v2046 = vmax.f32 %v2004, 0.0
        %v2047 = vmax.f32 %v2009, 0.0
        %v2048 = vmax.f32 %v2012, 0.0
        %v2049 = vmax.f32 %v2017, 0.0
        %v2050 = vmax.f32 %v2020, 0.0
        %v2051 = vmax.f32 %v2025, 0.0
        %v2052 = vmax.f32 %v2028, 0.0
        %v2053 = vmax.f32 %v2033, 0.0
        %v2054 = vmax.f32 %v2036, 0.0
        %v2055 = vsel %vm588, %v2039, 0.0
        %v2056 = vsel %vm588, %v2040, 0.0
        %v2057 = vadd.f32 %v2055, %v2056
        %v2058 = vrot.slane %v2057, 4
        %v2059 = vadd.f32 %v2057, %v2058
        %v2060 = vrot.slane %v2059, 2
        %v2061 = vadd.f32 %v2059, %v2060
        %v2062 = vrot.slane %v2061, 1
        %v2063 = vadd.f32 %v2061, %v2062
        %v2064 = vsel %vm588, %v2041, 0.0
        %v2065 = vsel %vm588, %v2042, 0.0
        %v2066 = vadd.f32 %v2064, %v2065
        %v2067 = vrot.slane %v2066, 4
        %v2068 = vadd.f32 %v2066, %v2067
        %v2069 = vrot.slane %v2068, 2
        %v2070 = vadd.f32 %v2068, %v2069
        %v2071 = vrot.slane %v2070, 1
        %v2072 = vadd.f32 %v2070, %v2071
        %v2073 = vsel %vm588, %v2043, 0.0
        %v2074 = vsel %vm588, %v2044, 0.0
        %v2075 = vadd.f32 %v2073, %v2074
        %v2076 = vrot.slane %v2075, 4
        %v2077 = vadd.f32 %v2075, %v2076
        %v2078 = vrot.slane %v2077, 2
        %v2079 = vadd.f32 %v2077, %v2078
        %v2080 = vrot.slane %v2079, 1
        %v2081 = vadd.f32 %v2079, %v2080
        %v2082 = vsel %vm588, %v2045, 0.0
        %v2083 = vsel %vm588, %v2046, 0.0
        %v2084 = vadd.f32 %v2082, %v2083
        %v2085 = vrot.slane %v2084, 4
        %v2086 = vadd.f32 %v2084, %v2085
        %v2087 = vrot.slane %v2086, 2
        %v2088 = vadd.f32 %v2086, %v2087
        %v2089 = vrot.slane %v2088, 1
        %v2090 = vadd.f32 %v2088, %v2089
        %v2091 = vsel %vm588, %v2047, 0.0
        %v2092 = vsel %vm588, %v2048, 0.0
        %v2093 = vadd.f32 %v2091, %v2092
        %v2094 = vrot.slane %v2093, 4
        %v2095 = vadd.f32 %v2093, %v2094
        %v2096 = vrot.slane %v2095, 2
        %v2097 = vadd.f32 %v2095, %v2096
        %v2098 = vrot.slane %v2097, 1
        %v2099 = vadd.f32 %v2097, %v2098
        %v2100 = vsel %vm588, %v2049, 0.0
        %v2101 = vsel %vm588, %v2050, 0.0
        %v2102 = vadd.f32 %v2100, %v2101
        %v2103 = vrot.slane %v2102, 4
        %v2104 = vadd.f32 %v2102, %v2103
        %v2105 = vrot.slane %v2104, 2
        %v2106 = vadd.f32 %v2104, %v2105
        %v2107 = vrot.slane %v2106, 1
        %v2108 = vadd.f32 %v2106, %v2107
        %v2109 = vsel %vm588, %v2051, 0.0
        %v2110 = vsel %vm588, %v2052, 0.0
        %v2111 = vadd.f32 %v2109, %v2110
        %v2112 = vrot.slane %v2111, 4
        %v2113 = vadd.f32 %v2111, %v2112
        %v2114 = vrot.slane %v2113, 2
        %v2115 = vadd.f32 %v2113, %v2114
        %v2116 = vrot.slane %v2115, 1
        %v2117 = vadd.f32 %v2115, %v2116
        %v2118 = vsel %vm588, %v2053, 0.0
        %v2119 = vsel %vm588, %v2054, 0.0
        %v2120 = vadd.f32 %v2118, %v2119
        %v2121 = vrot.slane %v2120, 4
        %v2122 = vadd.f32 %v2120, %v2121
        %v2123 = vrot.slane %v2122, 2
        %v2124 = vadd.f32 %v2122, %v2123
        %v2125 = vrot.slane %v2124, 1
        %v2126 = vadd.f32 %v2124, %v2125
        %v2127 = vmul.f32 %v2063, %v955
        %v2128 = vmul.f32 %v2072, %v955
        %v2129 = vmul.f32 %v2081, %v955
        %v2130 = vmul.f32 %v2090, %v955
        %v2131 = vmul.f32 %v2099, %v955
        %v2132 = vmul.f32 %v2108, %v955
        %v2133 = vmul.f32 %v2117, %v955
        %v2134 = vmul.f32 %v2126, %v955
        %v2135 = vsub.f32 %v2039, %v2127
        %v2136 = vsub.f32 %v2040, %v2127
        %v2137 = vsub.f32 %v2041, %v2128
        %v2138 = vsub.f32 %v2042, %v2128
        %v2139 = vsub.f32 %v2043, %v2129
        %v2140 = vsub.f32 %v2044, %v2129
        %v2141 = vsub.f32 %v2045, %v2130
        %v2142 = vsub.f32 %v2046, %v2130
        %v2143 = vsub.f32 %v2047, %v2131
        %v2144 = vsub.f32 %v2048, %v2131
        %v2145 = vsub.f32 %v2049, %v2132
        %v2146 = vsub.f32 %v2050, %v2132
        %v2147 = vsub.f32 %v2051, %v2133
        %v2148 = vsub.f32 %v2052, %v2133
        %v2149 = vsub.f32 %v2053, %v2134
        %v2150 = vsub.f32 %v2054, %v2134
        %v2151 = vmul.f32 %v2135, %v2135
        %v2152 = vmul.f32 %v2136, %v2136
        %v2153 = vmul.f32 %v2137, %v2137
        %v2154 = vmul.f32 %v2138, %v2138
        %v2155 = vmul.f32 %v2139, %v2139
        %v2156 = vmul.f32 %v2140, %v2140
        %v2157 = vmul.f32 %v2141, %v2141
        %v2158 = vmul.f32 %v2142, %v2142
        %v2159 = vmul.f32 %v2143, %v2143
        %v2160 = vmul.f32 %v2144, %v2144
        %v2161 = vmul.f32 %v2145, %v2145
        %v2162 = vmul.f32 %v2146, %v2146
        %v2163 = vmul.f32 %v2147, %v2147
        %v2164 = vmul.f32 %v2148, %v2148
        %v2165 = vmul.f32 %v2149, %v2149
        %v2166 = vmul.f32 %v2150, %v2150
        %v2167 = vsel %vm588, %v2151, 0.0
        %2168 = vadd.xlane.f32.xlu0 %v2167
        %v2169 = vpop.xlane.xlu0 %2168
        %v2170 = vsel %vm588, %v2152, 0.0
        %2171 = vadd.xlane.f32.xlu0 %v2170
        %v2172 = vpop.xlane.xlu0 %2171
        %v2173 = vsel %vm588, %v2153, 0.0
        %2174 = vadd.xlane.f32.xlu0 %v2173
        %v2175 = vpop.xlane.xlu0 %2174
        %v2176 = vsel %vm588, %v2154, 0.0
        %2177 = vadd.xlane.f32.xlu0 %v2176
        %v2178 = vpop.xlane.xlu0 %2177
        %v2179 = vsel %vm588, %v2155, 0.0
        %2180 = vadd.xlane.f32.xlu0 %v2179
        %v2181 = vpop.xlane.xlu0 %2180
        %v2182 = vsel %vm588, %v2156, 0.0
        %2183 = vadd.xlane.f32.xlu0 %v2182
        %v2184 = vpop.xlane.xlu0 %2183
        %v2185 = vsel %vm588, %v2157, 0.0
        %2186 = vadd.xlane.f32.xlu0 %v2185
        %v2187 = vpop.xlane.xlu0 %2186
        %v2188 = vsel %vm588, %v2158, 0.0
        %2189 = vadd.xlane.f32.xlu0 %v2188
        %v2190 = vpop.xlane.xlu0 %2189
        %v2191 = vsel %vm588, %v2159, 0.0
        %2192 = vadd.xlane.f32.xlu0 %v2191
        %v2193 = vpop.xlane.xlu0 %2192
        %v2194 = vsel %vm588, %v2160, 0.0
        %2195 = vadd.xlane.f32.xlu0 %v2194
        %v2196 = vpop.xlane.xlu0 %2195
        %v2197 = vsel %vm588, %v2161, 0.0
        %2198 = vadd.xlane.f32.xlu0 %v2197
        %v2199 = vpop.xlane.xlu0 %2198
        %v2200 = vsel %vm588, %v2162, 0.0
        %2201 = vadd.xlane.f32.xlu0 %v2200
        %v2202 = vpop.xlane.xlu0 %2201
        %v2203 = vsel %vm588, %v2163, 0.0
        %2204 = vadd.xlane.f32.xlu0 %v2203
        %v2205 = vpop.xlane.xlu0 %2204
        %v2206 = vsel %vm588, %v2164, 0.0
        %2207 = vadd.xlane.f32.xlu0 %v2206
        %v2208 = vpop.xlane.xlu0 %2207
        %v2209 = vsel %vm588, %v2165, 0.0
        %2210 = vadd.xlane.f32.xlu0 %v2209
        %v2211 = vpop.xlane.xlu0 %2210
        %v2212 = vsel %vm588, %v2166, 0.0
        %2213 = vadd.xlane.f32.xlu0 %v2212
        %v2214 = vpop.xlane.xlu0 %2213
        %v2231 = vlaneseq
        %v2232 = vshrl.u32 %v2231, 7
        %v2233 = vsub.s32 %v1061, %v2232
        %v2234 = vrot.slane %v2169, %v2233
        %v2235 = vlaneseq
        %v2236 = vshrl.u32 %v2235, 7
        %v2237 = vsub.s32 %v1066, %v2236
        %v2238 = vrot.slane %v2172, %v2237
        %v2239 = vsel %vm1071, %v2238, %v2234
        %v2240 = vlaneseq
        %v2241 = vshrl.u32 %v2240, 7
        %v2242 = vsub.s32 %v1061, %v2241
        %v2243 = vrot.slane %v2175, %v2242
        %v2244 = vlaneseq
        %v2245 = vshrl.u32 %v2244, 7
        %v2246 = vsub.s32 %v1066, %v2245
        %v2247 = vrot.slane %v2178, %v2246
        %v2248 = vsel %vm1071, %v2247, %v2243
        %v2249 = vlaneseq
        %v2250 = vshrl.u32 %v2249, 7
        %v2251 = vsub.s32 %v1061, %v2250
        %v2252 = vrot.slane %v2181, %v2251
        %v2253 = vlaneseq
        %v2254 = vshrl.u32 %v2253, 7
        %v2255 = vsub.s32 %v1066, %v2254
        %v2256 = vrot.slane %v2184, %v2255
        %v2257 = vsel %vm1071, %v2256, %v2252
        %v2258 = vlaneseq
        %v2259 = vshrl.u32 %v2258, 7
        %v2260 = vsub.s32 %v1061, %v2259
        %v2261 = vrot.slane %v2187, %v2260
        %v2262 = vlaneseq
        %v2263 = vshrl.u32 %v2262, 7
        %v2264 = vsub.s32 %v1066, %v2263
        %v2265 = vrot.slane %v2190, %v2264
        %v2266 = vsel %vm1071, %v2265, %v2261
        %v2267 = vlaneseq
        %v2268 = vshrl.u32 %v2267, 7
        %v2269 = vsub.s32 %v1061, %v2268
        %v2270 = vrot.slane %v2193, %v2269
        %v2271 = vlaneseq
        %v2272 = vshrl.u32 %v2271, 7
        %v2273 = vsub.s32 %v1066, %v2272
        %v2274 = vrot.slane %v2196, %v2273
        %v2275 = vsel %vm1071, %v2274, %v2270
        %v2276 = vlaneseq
        %v2277 = vshrl.u32 %v2276, 7
        %v2278 = vsub.s32 %v1061, %v2277
        %v2279 = vrot.slane %v2199, %v2278
        %v2280 = vlaneseq
        %v2281 = vshrl.u32 %v2280, 7
        %v2282 = vsub.s32 %v1066, %v2281
        %v2283 = vrot.slane %v2202, %v2282
        %v2284 = vsel %vm1071, %v2283, %v2279
        %v2285 = vlaneseq
        %v2286 = vshrl.u32 %v2285, 7
        %v2287 = vsub.s32 %v1061, %v2286
        %v2288 = vrot.slane %v2205, %v2287
        %v2289 = vlaneseq
        %v2290 = vshrl.u32 %v2289, 7
        %v2291 = vsub.s32 %v1066, %v2290
        %v2292 = vrot.slane %v2208, %v2291
        %v2293 = vsel %vm1071, %v2292, %v2288
        %v2294 = vlaneseq
        %v2295 = vshrl.u32 %v2294, 7
        %v2296 = vsub.s32 %v1061, %v2295
        %v2297 = vrot.slane %v2211, %v2296
        %v2298 = vlaneseq
        %v2299 = vshrl.u32 %v2298, 7
        %v2300 = vsub.s32 %v1066, %v2299
        %v2301 = vrot.slane %v2214, %v2300
        %v2302 = vsel %vm1071, %v2301, %v2297
        %v2303 = vsel %vm1136, %v2248, %v2239
        %v2304 = vsel %vm1138, %v2257, %v2303
        %v2305 = vsel %vm1140, %v2266, %v2304
        %v2306 = vsel %vm1142, %v2275, %v2305
        %v2307 = vsel %vm1144, %v2284, %v2306
        %v2308 = vsel %vm1146, %v2293, %v2307
        %v2309 = vsel %vm1148, %v2302, %v2308
        %v2311 = vsel %vm1151, %v2309, 0.0
        %2312 = vadd.xlane.f32.xlu0 %v2311
        %v2313 = vpop.xlane.xlu0 %2312
        %v2314 = vmul.f32 %v2313, %v955
        %v2315 = vadd.f32 %v2314, 1e-05
        %v2316 = vrsqrt.pop %v2315
        %v2318 = vlaneseq
        %v2319 = vshrl.u32 %v2318, 7
        %v2320 = vsub.s32 0, %v2319
        %v2321 = vrot.slane %v2316, %v2320
        %v2322 = vlaneseq
        %v2323 = vshrl.u32 %v2322, 7
        %v2324 = vsub.s32 1, %v2323
        %v2325 = vrot.slane %v2316, %v2324
        %v2326 = vlaneseq
        %v2327 = vshrl.u32 %v2326, 7
        %v2328 = vsub.s32 2, %v2327
        %v2329 = vrot.slane %v2316, %v2328
        %v2330 = vlaneseq
        %v2331 = vshrl.u32 %v2330, 7
        %v2332 = vsub.s32 3, %v2331
        %v2333 = vrot.slane %v2316, %v2332
        %v2334 = vlaneseq
        %v2335 = vshrl.u32 %v2334, 7
        %v2336 = vsub.s32 4, %v2335
        %v2337 = vrot.slane %v2316, %v2336
        %v2338 = vlaneseq
        %v2339 = vshrl.u32 %v2338, 7
        %v2340 = vsub.s32 5, %v2339
        %v2341 = vrot.slane %v2316, %v2340
        %v2342 = vlaneseq
        %v2343 = vshrl.u32 %v2342, 7
        %v2344 = vsub.s32 6, %v2343
        %v2345 = vrot.slane %v2316, %v2344
        %v2346 = vlaneseq
        %v2347 = vshrl.u32 %v2346, 7
        %v2348 = vsub.s32 7, %v2347
        %v2349 = vrot.slane %v2316, %v2348
        %v2358 = vmul.f32 %v2321, %v2135
        %v2359 = vmul.f32 %v2321, %v2136
        %v2360 = vmul.f32 %v2325, %v2137
        %v2361 = vmul.f32 %v2325, %v2138
        %v2362 = vmul.f32 %v2329, %v2139
        %v2363 = vmul.f32 %v2329, %v2140
        %v2364 = vmul.f32 %v2333, %v2141
        %v2365 = vmul.f32 %v2333, %v2142
        %v2366 = vmul.f32 %v2337, %v2143
        %v2367 = vmul.f32 %v2337, %v2144
        %v2368 = vmul.f32 %v2341, %v2145
        %v2369 = vmul.f32 %v2341, %v2146
        %v2370 = vmul.f32 %v2345, %v2147
        %v2371 = vmul.f32 %v2345, %v2148
        %v2372 = vmul.f32 %v2349, %v2149
        %v2373 = vmul.f32 %v2349, %v2150
        %v2374 = vsel %vm588, %v2358, -inf
        %v2375 = vrot.slane %v2374, 4
        %v2376 = vmax.f32 %v2374, %v2375
        %v2377 = vrot.slane %v2376, 2
        %v2378 = vmax.f32 %v2376, %v2377
        %v2379 = vrot.slane %v2378, 1
        %v2380 = vmax.f32 %v2378, %v2379
        %v2381 = vsel %vm588, %v2359, -inf
        %v2382 = vrot.slane %v2381, 4
        %v2383 = vmax.f32 %v2381, %v2382
        %v2384 = vrot.slane %v2383, 2
        %v2385 = vmax.f32 %v2383, %v2384
        %v2386 = vrot.slane %v2385, 1
        %v2387 = vmax.f32 %v2385, %v2386
        %v2388 = vsel %vm588, %v2360, -inf
        %v2389 = vrot.slane %v2388, 4
        %v2390 = vmax.f32 %v2388, %v2389
        %v2391 = vrot.slane %v2390, 2
        %v2392 = vmax.f32 %v2390, %v2391
        %v2393 = vrot.slane %v2392, 1
        %v2394 = vmax.f32 %v2392, %v2393
        %v2395 = vsel %vm588, %v2361, -inf
        %v2396 = vrot.slane %v2395, 4
        %v2397 = vmax.f32 %v2395, %v2396
        %v2398 = vrot.slane %v2397, 2
        %v2399 = vmax.f32 %v2397, %v2398
        %v2400 = vrot.slane %v2399, 1
        %v2401 = vmax.f32 %v2399, %v2400
        %v2402 = vsel %vm588, %v2362, -inf
        %v2403 = vrot.slane %v2402, 4
        %v2404 = vmax.f32 %v2402, %v2403
        %v2405 = vrot.slane %v2404, 2
        %v2406 = vmax.f32 %v2404, %v2405
        %v2407 = vrot.slane %v2406, 1
        %v2408 = vmax.f32 %v2406, %v2407
        %v2409 = vsel %vm588, %v2363, -inf
        %v2410 = vrot.slane %v2409, 4
        %v2411 = vmax.f32 %v2409, %v2410
        %v2412 = vrot.slane %v2411, 2
        %v2413 = vmax.f32 %v2411, %v2412
        %v2414 = vrot.slane %v2413, 1
        %v2415 = vmax.f32 %v2413, %v2414
        %v2416 = vsel %vm588, %v2364, -inf
        %v2417 = vrot.slane %v2416, 4
        %v2418 = vmax.f32 %v2416, %v2417
        %v2419 = vrot.slane %v2418, 2
        %v2420 = vmax.f32 %v2418, %v2419
        %v2421 = vrot.slane %v2420, 1
        %v2422 = vmax.f32 %v2420, %v2421
        %v2423 = vsel %vm588, %v2365, -inf
        %v2424 = vrot.slane %v2423, 4
        %v2425 = vmax.f32 %v2423, %v2424
        %v2426 = vrot.slane %v2425, 2
        %v2427 = vmax.f32 %v2425, %v2426
        %v2428 = vrot.slane %v2427, 1
        %v2429 = vmax.f32 %v2427, %v2428
        %v2430 = vsel %vm588, %v2366, -inf
        %v2431 = vrot.slane %v2430, 4
        %v2432 = vmax.f32 %v2430, %v2431
        %v2433 = vrot.slane %v2432, 2
        %v2434 = vmax.f32 %v2432, %v2433
        %v2435 = vrot.slane %v2434, 1
        %v2436 = vmax.f32 %v2434, %v2435
        %v2437 = vsel %vm588, %v2367, -inf
        %v2438 = vrot.slane %v2437, 4
        %v2439 = vmax.f32 %v2437, %v2438
        %v2440 = vrot.slane %v2439, 2
        %v2441 = vmax.f32 %v2439, %v2440
        %v2442 = vrot.slane %v2441, 1
        %v2443 = vmax.f32 %v2441, %v2442
        %v2444 = vsel %vm588, %v2368, -inf
        %v2445 = vrot.slane %v2444, 4
        %v2446 = vmax.f32 %v2444, %v2445
        %v2447 = vrot.slane %v2446, 2
        %v2448 = vmax.f32 %v2446, %v2447
        %v2449 = vrot.slane %v2448, 1
        %v2450 = vmax.f32 %v2448, %v2449
        %v2451 = vsel %vm588, %v2369, -inf
        %v2452 = vrot.slane %v2451, 4
        %v2453 = vmax.f32 %v2451, %v2452
        %v2454 = vrot.slane %v2453, 2
        %v2455 = vmax.f32 %v2453, %v2454
        %v2456 = vrot.slane %v2455, 1
        %v2457 = vmax.f32 %v2455, %v2456
        %v2458 = vsel %vm588, %v2370, -inf
        %v2459 = vrot.slane %v2458, 4
        %v2460 = vmax.f32 %v2458, %v2459
        %v2461 = vrot.slane %v2460, 2
        %v2462 = vmax.f32 %v2460, %v2461
        %v2463 = vrot.slane %v2462, 1
        %v2464 = vmax.f32 %v2462, %v2463
        %v2465 = vsel %vm588, %v2371, -inf
        %v2466 = vrot.slane %v2465, 4
        %v2467 = vmax.f32 %v2465, %v2466
        %v2468 = vrot.slane %v2467, 2
        %v2469 = vmax.f32 %v2467, %v2468
        %v2470 = vrot.slane %v2469, 1
        %v2471 = vmax.f32 %v2469, %v2470
        %v2472 = vsel %vm588, %v2372, -inf
        %v2473 = vrot.slane %v2472, 4
        %v2474 = vmax.f32 %v2472, %v2473
        %v2475 = vrot.slane %v2474, 2
        %v2476 = vmax.f32 %v2474, %v2475
        %v2477 = vrot.slane %v2476, 1
        %v2478 = vmax.f32 %v2476, %v2477
        %v2479 = vsel %vm588, %v2373, -inf
        %v2480 = vrot.slane %v2479, 4
        %v2481 = vmax.f32 %v2479, %v2480
        %v2482 = vrot.slane %v2481, 2
        %v2483 = vmax.f32 %v2481, %v2482
        %v2484 = vrot.slane %v2483, 1
        %v2485 = vmax.f32 %v2483, %v2484
        %v2502 = vsel %vm1136, %v2387, %v2380
        %v2503 = vsel %vm1138, %v2394, %v2502
        %v2504 = vsel %vm1140, %v2401, %v2503
        %v2505 = vsel %vm1142, %v2408, %v2504
        %v2506 = vsel %vm1144, %v2415, %v2505
        %v2507 = vsel %vm1146, %v2422, %v2506
        %v2508 = vsel %vm1148, %v2429, %v2507
        %v2509 = vsel %vm1136, %v2443, %v2436
        %v2510 = vsel %vm1138, %v2450, %v2509
        %v2511 = vsel %vm1140, %v2457, %v2510
        %v2512 = vsel %vm1142, %v2464, %v2511
        %v2513 = vsel %vm1144, %v2471, %v2512
        %v2514 = vsel %vm1146, %v2478, %v2513
        %v2515 = vsel %vm1148, %v2485, %v2514
        %2520 = vrot.lane.b32.xlu0 %v573, 32
        %v2521 = vpop.permute.xlu0 %2520
        %2522 = vrot.lane.b32.xlu0 %v574, 32
        %v2523 = vpop.permute.xlu0 %2522
        %2524 = vrot.lane.b32.xlu0 %v575, 32
        %v2525 = vpop.permute.xlu0 %2524
        %2526 = vrot.lane.b32.xlu0 %v576, 32
        %v2527 = vpop.permute.xlu0 %2526
        %2532 = vrot.lane.b32.xlu0 %v360, 32
        %v2533 = vpop.permute.xlu0 %2532
        %v2535 = vsel %vm588, %v2508, 0
        %v2537 = vsel %vm588, %v2515, 0
        %2539 = vmatprep.subr.mxu0 0.0
        %2540 = vmatpush1.msra.mxu0 %v2521
        %2541 = vmatprep.subr.mxu0 0.0
        %2542 = vmatpush1.msra.mxu0 %v2523
        %2543 = vmatprep.subr.mxu0 0.0
        %2544 = vmatpush1.msra.mxu0 %v2525
        %2545 = vmatprep.subr.mxu0 0.0
        %2546 = vmatpush1.msra.mxu0 %v2527
        %2547 = vmatprep.subr.mxu0 0.0
        %2548 = vmatpush1.msra.mxu0 0.0
        %2549 = vmatprep.subr.mxu0 0.0
        %2550 = vmatpush1.msra.mxu0 0.0
        %2551 = vmatprep.subr.mxu0 0.0
        %2552 = vmatpush1.msra.mxu0 0.0
        %2553 = vmatprep.subr.mxu0 0.0
        %2554 = vmatpush1.msra.mxu0 0.0
        %2555 = vmatprep.subr.mxu0 0.0
        %2556 = vmatpush1.msra.mxu0 0.0
        %2557 = vmatprep.subr.mxu0 0.0
        %2558 = vmatpush1.msra.mxu0 0.0
        %2559 = vmatprep.subr.mxu0 0.0
        %2560 = vmatpush1.msra.mxu0 0.0
        %2561 = vmatprep.subr.mxu0 0.0
        %2562 = vmatpush1.msra.mxu0 0.0
        %2563 = vmatprep.subr.mxu0 0.0
        %2564 = vmatpush1.msra.mxu0 0.0
        %2565 = vmatprep.subr.mxu0 0.0
        %2566 = vmatpush1.msra.mxu0 0.0
        %2567 = vmatprep.subr.mxu0 0.0
        %2568 = vmatpush1.msra.mxu0 0.0
        %2569 = vmatprep.subr.mxu0 0.0
        %2570 = vmatpush1.msra.mxu0 0.0
        %2571 = vmatprep.subr.mxu0 0.0
        %2572 = vmatpush1.msra.mxu0 0.0
        %2573 = vmatprep.subr.mxu0 0.0
        %2574 = vmatpush1.msra.mxu0 0.0
        %2575 = vmatprep.subr.mxu0 0.0
        %2576 = vmatpush1.msra.mxu0 0.0
        %2577 = vmatprep.subr.mxu0 0.0
        %2578 = vmatpush1.msra.mxu0 0.0
        %2579 = vmatprep.subr.mxu0 0.0
        %2580 = vmatpush1.msra.mxu0 0.0
        %2581 = vmatprep.subr.mxu0 0.0
        %2582 = vmatpush1.msra.mxu0 0.0
        %2583 = vmatprep.subr.mxu0 0.0
        %2584 = vmatpush1.msra.mxu0 0.0
        %2585 = vmatprep.subr.mxu0 0.0
        %2586 = vmatpush1.msra.mxu0 0.0
        %2587 = vmatprep.subr.mxu0 0.0
        %2588 = vmatpush1.msra.mxu0 0.0
        %2589 = vmatprep.subr.mxu0 0.0
        %2590 = vmatpush1.msra.mxu0 0.0
        %2591 = vmatprep.subr.mxu0 0.0
        %2592 = vmatpush1.msra.mxu0 0.0
        %2593 = vmatprep.subr.mxu0 0.0
        %2594 = vmatpush1.msra.mxu0 0.0
        %2595 = vmatprep.subr.mxu0 0.0
        %2596 = vmatpush1.msra.mxu0 0.0
        %2597 = vmatprep.subr.mxu0 0.0
        %2598 = vmatpush1.msra.mxu0 0.0
        %2599 = vmatprep.subr.mxu0 0.0
        %2600 = vmatpush1.msra.mxu0 0.0
        %2601 = vmatprep.subr.mxu0 0.0
        %2602 = vmatpush1.msra.mxu0 0.0
        %2603 = vmatprep.mubr.f32.mxu0 0.0
        %2604 = vmatmul.mubr.f32.gmra.mrb[0].mxu0 %v2535
        %v2605 = vpop.f32.mrb[0].mxu0
        %v2606 = vadd.f32 %v2533, %v2605
        %v2607 = vpop.f32.mrb[0].mxu0
        %2608 = vmatprep.mubr.f32.mxu0 0.0
        %2609 = vmatmul.mubr.f32.gmra.mrb[0].mxu0 %v2537
        %v2610 = vpop.f32.mrb[0].mxu0
        %v2611 = vadd.f32 %v2533, %v2610
        %v2612 = vpop.f32.mrb[0].mxu0
        %2613 = vdwg.mxu0
        %v2614 = vmax.f32 %v2606, 0.0
        %v2615 = vmax.f32 %v2611, 0.0
        %v2616 = vld [vmem:[%s4] sm:$0xff]
        %v2617 = vld [vmem:[%s4 + $0x8] sm:$0xff]
        %v2618 = vld [vmem:[%s4 + $0x10] sm:$0xff]
        %v2619 = vld [vmem:[%s4 + $0x18] sm:$0xff]
        %v2620 = vld [vmem:[%s4 + $0x20] sm:$0x1]
        %v2621 = vlaneseq
        %v2622 = vshrl.u32 %v2621, 7
        %v2623 = vsub.s32 0, %v2622
        %v2624 = vrot.slane %v2620, %v2623
        %v2626 = vsel %vm588, %v2614, 0
        %v2629 = vsel %vm588, %v2615, 0
        %2631 = vmatprep.subr.mxu0 0.0
        %2632 = vmatpush1.msra.mxu0 %v2616
        %2633 = vmatprep.subr.mxu0 0.0
        %2634 = vmatpush1.msra.mxu0 %v2617
        %2635 = vmatprep.subr.mxu0 0.0
        %2636 = vmatpush1.msra.mxu0 %v2618
        %2637 = vmatprep.subr.mxu0 0.0
        %2638 = vmatpush1.msra.mxu0 %v2619
        %2639 = vmatprep.subr.mxu0 0.0
        %2640 = vmatpush1.msra.mxu0 0.0
        %2641 = vmatprep.subr.mxu0 0.0
        %2642 = vmatpush1.msra.mxu0 0.0
        %2643 = vmatprep.subr.mxu0 0.0
        %2644 = vmatpush1.msra.mxu0 0.0
        %2645 = vmatprep.subr.mxu0 0.0
        %2646 = vmatpush1.msra.mxu0 0.0
        %2647 = vmatprep.subr.mxu0 0.0
        %2648 = vmatpush1.msra.mxu0 0.0
        %2649 = vmatprep.subr.mxu0 0.0
        %2650 = vmatpush1.msra.mxu0 0.0
        %2651 = vmatprep.subr.mxu0 0.0
        %2652 = vmatpush1.msra.mxu0 0.0
        %2653 = vmatprep.subr.mxu0 0.0
        %2654 = vmatpush1.msra.mxu0 0.0
        %2655 = vmatprep.subr.mxu0 0.0
        %2656 = vmatpush1.msra.mxu0 0.0
        %2657 = vmatprep.subr.mxu0 0.0
        %2658 = vmatpush1.msra.mxu0 0.0
        %2659 = vmatprep.subr.mxu0 0.0
        %2660 = vmatpush1.msra.mxu0 0.0
        %2661 = vmatprep.subr.mxu0 0.0
        %2662 = vmatpush1.msra.mxu0 0.0
        %2663 = vmatprep.subr.mxu0 0.0
        %2664 = vmatpush1.msra.mxu0 0.0
        %2665 = vmatprep.subr.mxu0 0.0
        %2666 = vmatpush1.msra.mxu0 0.0
        %2667 = vmatprep.subr.mxu0 0.0
        %2668 = vmatpush1.msra.mxu0 0.0
        %2669 = vmatprep.subr.mxu0 0.0
        %2670 = vmatpush1.msra.mxu0 0.0
        %2671 = vmatprep.subr.mxu0 0.0
        %2672 = vmatpush1.msra.mxu0 0.0
        %2673 = vmatprep.subr.mxu0 0.0
        %2674 = vmatpush1.msra.mxu0 0.0
        %2675 = vmatprep.subr.mxu0 0.0
        %2676 = vmatpush1.msra.mxu0 0.0
        %2677 = vmatprep.subr.mxu0 0.0
        %2678 = vmatpush1.msra.mxu0 0.0
        %2679 = vmatprep.subr.mxu0 0.0
        %2680 = vmatpush1.msra.mxu0 0.0
        %2681 = vmatprep.subr.mxu0 0.0
        %2682 = vmatpush1.msra.mxu0 0.0
        %2683 = vmatprep.subr.mxu0 0.0
        %2684 = vmatpush1.msra.mxu0 0.0
        %2685 = vmatprep.subr.mxu0 0.0
        %2686 = vmatpush1.msra.mxu0 0.0
        %2687 = vmatprep.subr.mxu0 0.0
        %2688 = vmatpush1.msra.mxu0 0.0
        %2689 = vmatprep.subr.mxu0 0.0
        %2690 = vmatpush1.msra.mxu0 0.0
        %2691 = vmatprep.subr.mxu0 0.0
        %2692 = vmatpush1.msra.mxu0 0.0
        %2693 = vmatprep.subr.mxu0 0.0
        %2694 = vmatpush1.msra.mxu0 0.0
        %2695 = vmatprep.mubr.f32.mxu0 0.0
        %2696 = vmatmul.mubr.f32.gmra.mrb[0].mxu0 %v2626
        %v2697 = vpop.f32.mrb[0].mxu0
        %v2698 = vadd.f32 %v2624, %v2697
        %v2699 = vpop.f32.mrb[0].mxu0
        %2700 = vmatprep.mubr.f32.mxu0 0.0
        %2701 = vmatmul.mubr.f32.gmra.mrb[0].mxu0 %v2629
        %v2702 = vpop.f32.mrb[0].mxu0
        %v2703 = vadd.f32 %v2624, %v2702
        %v2704 = vpop.f32.mrb[0].mxu0
        %2705 = vdwg.mxu0
        %2706 = vst [vmem:[%s232] sm:$0xff] %v2698
        %2707 = vst [vmem:[%s232 + $0x8] sm:$0xff] %v2703
        %s2708 = sand.u32 %s142, 1
        %s2709 = scalar_lea.sflag [#allocation3], %s2708
        %s2710 = sand.u32 %s142, 1
        %s2711 = smul.addr %s2710, 16
        %s2712 = scalar_lea.vmem [#allocation2], %s2711
        // Predicated region
        $region41: #{tpu_custom_call.1} parent=39 // pred_check
          %p2713 = pneg %p152
        $region42: #{tpu_custom_call.1} parent=39 // pred_check_branch
          %2715 = sbr.rel (%p2713) target = $region44
        $region43: #{tpu_custom_call.1} parent=39 // pred_region
          %s2717 = ssub.s32 256, 256
          %2718 = vsyncadd %s2709, %s2717
          %s2719 = smul.addr %s19, 2
          %s2720 = smul.addr %s2719, 128
          %s2721 = scalar_lea.hbm %s5, %s2720
          %s2722 = sshll.u32 %s2712, 4
          %s2723 = int_to_ptr.vmem [resolvable:$true] %s2722
          %2728 = dma.vmem_to_hbm [thread:$0]  %s2723, 256, %s2721, %s2709, 128, 128, 8
        $region44: #{tpu_custom_call.1} parent=39 // pred_fallthru
          _
      $region40: #{tpu_custom_call.1} parent=5 // pred_fallthru
        _
      %p2729 = scmp.le.s32.totalorder 2, %s14
      // Predicated region
      $region45: #{tpu_custom_call.1} parent=5 // pred_check
        %p2730 = pneg %p2729
      $region46: #{tpu_custom_call.1} parent=5 // pred_check_branch
        %2732 = sbr.rel (%p2730) target = $region48
      $region47: #{tpu_custom_call.1} parent=5 // pred_region
        %s2733 = ssub.s32 %s14, 2
        // Predicated region
        $region49: #{tpu_custom_call.1} parent=47 // pred_check
          %p2734 = pneg %p158
        $region50: #{tpu_custom_call.1} parent=47 // pred_check_branch
          %2736 = sbr.rel (%p2734) target = $region52
        $region51: #{tpu_custom_call.1} parent=47 // pred_region
          %s2737 = sand.u32 %s143, 1
          %s2738 = scalar_lea.sflag [#allocation3], %s2737
          %s2739 = sand.u32 %s143, 1
          %s2740 = smul.addr %s2739, 16
          %s2741 = scalar_lea.vmem [#allocation2], %s2740
          %2742 = dma.done %s2738, 256
        $region52: #{tpu_custom_call.1} parent=47 // pred_fallthru
          _
      $region48: #{tpu_custom_call.1} parent=5 // pred_fallthru
        _
    $region6: #{tpu_custom_call.1} parent=1 // loop_footer
      %s18 = sadd.s32 1, %s14
    $region7: #{tpu_custom_call.1} parent=1 // loop_footer_branch
      %13 = sbr.rel target = $region3
    $region8: #{tpu_custom_call.1} parent=1 // loop_exit
      _
    %2743 = vsyncpa [#allocation3], 1
    %s2744 = scalar_lea.sflag [#allocation3], 1
    %2745 = vsyncpa %s2744, 1

</llo_original>
